<compile_context>
chip_gen: v7x
topology: tpu7x:2x2x1
jax: 0.10.0
libtpu: 0.0.40
codegen_flags: <defaults>
</compile_context>

<pallas_src>
import jax
import jax.numpy as jnp
from jax.experimental import pallas as pl
from jax.experimental.pallas import tpu as pltpu

STATE_SIZE = 22
ACTION_SIZE = 6
FC1, FC2, FC3 = 400, 300, 200
HEAD_PAD = 128          # lane-dense padded head width; real logits in [:, :ACTION_SIZE]
LN_EPS = 1e-5           # PyTorch nn.LayerNorm default
MAX_TB = 2048           # max batch-tile rows
TILE_QUANT = 256        # tile-row granularity for multi-tile batches (MXU pass width on v6e/v7x)


def _round_up(x, m):
    return (x + m - 1) // m * m


def _choose_tb(B):
    """Pick the batch-tile row count (static, B is a trace-time Python int).

    Small batches get one tile (rounded to 8 sublanes).  Larger batches get at
    least two tiles -- so the "parallel" batch axis can be sharded over both
    v7x TensorCores -- with tile rows a multiple of 256, capped at MAX_TB, and
    sized from ceil(B / n_tiles) to keep padding waste low.
    """
    if B <= TILE_QUANT:
        return max(8, _round_up(B, 8))
    n_tiles = max(2, pl.cdiv(B, MAX_TB))
    return min(MAX_TB, _round_up(pl.cdiv(B, n_tiles), TILE_QUANT))


def _linear_ln_relu(h, w_ref, p_ref):
    """Fused Linear -> LayerNorm (biased var, eps=1e-5) -> ReLU on VMEM tiles.

    w_ref : (in, out)  bf16 weight (resident in VMEM)
    p_ref : (3, out)   f32 packed [bias; gamma; beta]
    """
    w = w_ref[...]
    z = jnp.dot(h.astype(w.dtype), w, preferred_element_type=jnp.float32)
    p = p_ref[...]
    z = z + p[0:1, :]                                           # bias
    mu = jnp.mean(z, axis=-1, keepdims=True)
    zc = z - mu
    var = jnp.mean(zc * zc, axis=-1, keepdims=True)             # two-pass variance
    zn = zc * jax.lax.rsqrt(var + LN_EPS)
    zn = zn * p[1:2, :] + p[2:3, :]                             # gamma, beta
    return jnp.maximum(zn, 0.0)


def actor_kernel(x_ref,
                 w1_ref, p1_ref,
                 w2_ref, p2_ref,
                 w3_ref, p3_ref,
                 w4_ref, b4_ref,
                 out_ref):
    h = x_ref[...]
    h = _linear_ln_relu(h, w1_ref, p1_ref)   # dropout == identity (eval mode)
    h = _linear_ln_relu(h, w2_ref, p2_ref)
    h = _linear_ln_relu(h, w3_ref, p3_ref)
    w4 = w4_ref[...]
    logits = jnp.dot(h.astype(w4.dtype), w4,
                     preferred_element_type=jnp.float32) + b4_ref[...]
    out_ref[...] = jax.nn.sigmoid(logits).astype(out_ref.dtype)


@jax.jit
def enhanced_actor_forward(state, params):
    """state: (B, STATE_SIZE) or (STATE_SIZE,) f32 -> action in [0,1], (B, ACTION_SIZE) f32."""
    if state.ndim == 1:
        state = state[None, :]
    B = state.shape[0]

    TB = _choose_tb(B)
    grid_b = pl.cdiv(B, TB)
    B_pad = grid_b * TB
    if B_pad != B:
        state = jnp.pad(state, ((0, B_pad - B), (0, 0)))   # zero rows, sliced off below

    def const(shape):   # weight / param tensors: same block every grid step (stay resident)
        return pl.BlockSpec(shape, lambda i: (0, 0))

    in_specs = [
        pl.BlockSpec((TB, STATE_SIZE), lambda i: (i, 0)),
        const((STATE_SIZE, FC1)), const((3, FC1)),
        const((FC1, FC2)),        const((3, FC2)),
        const((FC2, FC3)),        const((3, FC3)),
        const((FC3, HEAD_PAD)),   const((1, HEAD_PAD)),
    ]
    out_spec = pl.BlockSpec((TB, HEAD_PAD), lambda i: (i, 0))

    mm_terms = STATE_SIZE * FC1 + FC1 * FC2 + FC2 * FC3 + FC3 * HEAD_PAD
    weight_bytes = 2 * mm_terms                                  # bf16 weights
    param_bytes = 4 * (3 * (FC1 + FC2 + FC3) + HEAD_PAD)
    io_bytes = 4 * B_pad * STATE_SIZE + 2 * B_pad * HEAD_PAD     # f32 in, bf16 out
    cost = pl.CostEstimate(
        flops=2 * B_pad * mm_terms,
        transcendentals=B_pad * (3 + HEAD_PAD),                  # rsqrt per layer + sigmoid
        bytes_accessed=weight_bytes + param_bytes + io_bytes,
    )

    out = pl.pallas_call(
        actor_kernel,
        out_shape=jax.ShapeDtypeStruct((B_pad, HEAD_PAD), jnp.bfloat16),
        grid=(grid_b,),
        in_specs=in_specs,
        out_specs=out_spec,
        compiler_params=pltpu.CompilerParams(
            dimension_semantics=("parallel",),
            vmem_limit_bytes=32 << 20,
        ),
        cost_estimate=cost,
    )(state,
      params["w1"], params["p1"],
      params["w2"], params["p2"],
      params["w3"], params["p3"],
      params["w4p"], params["b4p"])

    # Columns 6..127 of the padded buffer hold sigmoid(0)=0.5; they are never exposed.
    return out[:B, :ACTION_SIZE].astype(jnp.float32)


def init_params(seed=0):
    """Deterministic init mirroring the PyTorch module's scheme.

    fanin_init uses bound = 1/sqrt(weight.size()[0]) = 1/sqrt(out_features)
    (that is literally what the reference code does), applied to weight and bias.
    LayerNorm: gamma=1, beta=0. fc4: U[-3e-3, 3e-3].
    Weights stored bf16 (MXU-native, halves HBM traffic); bias/LN params f32.
    """
    key = jax.random.PRNGKey(seed)
    ks = jax.random.split(key, 8)

    def fanin_linear(kw, kb, fan_in, fan_out):
        bound = 1.0 / (float(fan_out) ** 0.5)   # size()[0] == out_features
        w = jax.random.uniform(kw, (fan_in, fan_out), jnp.float32, -bound, bound)
        b = jax.random.uniform(kb, (1, fan_out), jnp.float32, -bound, bound)
        return w, b

    def pack_ln(b, units):
        return jnp.concatenate(
            [b, jnp.ones((1, units), jnp.float32), jnp.zeros((1, units), jnp.float32)],
            axis=0)                                              # (3, units): bias, gamma, beta

    w1, b1 = fanin_linear(ks[0], ks[1], STATE_SIZE, FC1)
    w2, b2 = fanin_linear(ks[2], ks[3], FC1, FC2)
    w3, b3 = fanin_linear(ks[4], ks[5], FC2, FC3)
    w4 = jax.random.uniform(ks[6], (FC3, ACTION_SIZE), jnp.float32, -3e-3, 3e-3)
    b4 = jax.random.uniform(ks[7], (1, ACTION_SIZE), jnp.float32, -3e-3, 3e-3)

    w4p = jnp.zeros((FC3, HEAD_PAD), jnp.float32).at[:, :ACTION_SIZE].set(w4)
    b4p = jnp.zeros((1, HEAD_PAD), jnp.float32).at[:, :ACTION_SIZE].set(b4)

    return {
        "w1": w1.astype(jnp.bfloat16), "p1": pack_ln(b1, FC1),
        "w2": w2.astype(jnp.bfloat16), "p2": pack_ln(b2, FC2),
        "w3": w3.astype(jnp.bfloat16), "p3": pack_ln(b3, FC3),
        "w4p": w4p.astype(jnp.bfloat16), "b4p": b4p,
    }


def reference_forward(state, params):
    """Pure-JAX f32 reference (weights upcast from bf16) for correctness checking."""
    if state.ndim == 1:
        state = state[None, :]
    h = state.astype(jnp.float32)
    for i in (1, 2, 3):
        w = params[f"w{i}"].astype(jnp.float32)
        p = params[f"p{i}"]
        b, g, be = p[0:1], p[1:2], p[2:3]
        z = h @ w + b
        mu = jnp.mean(z, axis=-1, keepdims=True)
        var = jnp.mean((z - mu) ** 2, axis=-1, keepdims=True)
        z = (z - mu) / jnp.sqrt(var + LN_EPS)
        h = jnp.maximum(z * g + be, 0.0)
    w4 = params["w4p"].astype(jnp.float32)[:, :ACTION_SIZE]
    b4 = params["b4p"][:, :ACTION_SIZE]
    return jax.nn.sigmoid(h @ w4 + b4)


if __name__ == "__main__":
    params = init_params(seed=0)
    key = jax.random.PRNGKey(0)

    # Small 2-D batch (single tile)
    batch = 8
    state = jax.random.normal(key, (batch, STATE_SIZE), jnp.float32)
    out = jax.block_until_ready(enhanced_actor_forward(state, params))
    ref = reference_forward(state, params)
    assert out.shape == (batch, ACTION_SIZE), out.shape
    assert bool(jnp.all(jnp.isfinite(out)))
    # bf16 MXU inputs + bf16 output store vs pure-f32 reference -> relaxed tolerance
    err = float(jnp.max(jnp.abs(out - ref)))
    assert err < 2e-2, err

    # 1-D state path (exercises unsqueeze + padding to a full 8-row tile)
    out1 = jax.block_until_ready(enhanced_actor_forward(state[0], params))
    assert out1.shape == (1, ACTION_SIZE), out1.shape
    err1 = float(jnp.max(jnp.abs(out1 - reference_forward(state[0], params))))
    assert err1 < 2e-2, err1

    # Multi-tile path (>= 2 tiles, 256-granular TB, batch padding sliced off)
    batch2 = 640
    state2 = jax.random.normal(jax.random.PRNGKey(1), (batch2, STATE_SIZE), jnp.float32)
    out2 = jax.block_until_ready(enhanced_actor_forward(state2, params))
    assert out2.shape == (batch2, ACTION_SIZE), out2.shape
    err2 = float(jnp.max(jnp.abs(out2 - reference_forward(state2, params))))
    assert err2 < 2e-2, err2

    print("KERNEL_OK")
</pallas_src>

<mosaic_0001>
module attributes {stable_mosaic.version = 11 : i64} {
  func.func @actor_kernel(%arg0: i32, %arg1: memref<8x22xf32, #tpu.memory_space<vmem>>, %arg2: memref<22x400xbf16, #tpu.memory_space<vmem>>, %arg3: memref<3x400xf32, #tpu.memory_space<vmem>>, %arg4: memref<400x300xbf16, #tpu.memory_space<vmem>>, %arg5: memref<3x300xf32, #tpu.memory_space<vmem>>, %arg6: memref<300x200xbf16, #tpu.memory_space<vmem>>, %arg7: memref<3x200xf32, #tpu.memory_space<vmem>>, %arg8: memref<200x128xbf16, #tpu.memory_space<vmem>>, %arg9: memref<1x128xf32, #tpu.memory_space<vmem>>, %arg10: memref<8x128xbf16, #tpu.memory_space<vmem>>) attributes {dimension_semantics = [#tpu.dimension_semantics<parallel>], iteration_bounds = array<i64: 1>, scalar_prefetch = 0 : i64, scratch_operands = 0 : i64, tpu.core_type = #tpu.core_type<tc>, window_params = [{transform_indices = @transform_0, window_bounds = array<i64: 8, 22>}, {pipeline_mode = #tpu.pipeline_mode<synchronous>, transform_indices = @transform_1, window_bounds = array<i64: 22, 400>}, {pipeline_mode = #tpu.pipeline_mode<synchronous>, transform_indices = @transform_2, window_bounds = array<i64: 3, 400>}, {pipeline_mode = #tpu.pipeline_mode<synchronous>, transform_indices = @transform_3, window_bounds = array<i64: 400, 300>}, {pipeline_mode = #tpu.pipeline_mode<synchronous>, transform_indices = @transform_4, window_bounds = array<i64: 3, 300>}, {pipeline_mode = #tpu.pipeline_mode<synchronous>, transform_indices = @transform_5, window_bounds = array<i64: 300, 200>}, {pipeline_mode = #tpu.pipeline_mode<synchronous>, transform_indices = @transform_6, window_bounds = array<i64: 3, 200>}, {pipeline_mode = #tpu.pipeline_mode<synchronous>, transform_indices = @transform_7, window_bounds = array<i64: 200, 128>}, {pipeline_mode = #tpu.pipeline_mode<synchronous>, transform_indices = @transform_8, window_bounds = array<i64: 1, 128>}, {transform_indices = @transform_9, window_bounds = array<i64: 8, 128>}]} {
    %c0 = arith.constant 0 : index
    %c0_0 = arith.constant 0 : index
    %0 = vector.load %arg1[%c0, %c0_0] : memref<8x22xf32, #tpu.memory_space<vmem>>, vector<8x22xf32>
    %c0_1 = arith.constant 0 : index
    %c0_2 = arith.constant 0 : index
    %1 = vector.load %arg2[%c0_1, %c0_2] : memref<22x400xbf16, #tpu.memory_space<vmem>>, vector<22x400xbf16>
    %2 = arith.truncf %0 : vector<8x22xf32> to vector<8x22xbf16>
    %cst = arith.constant dense<0.000000e+00> : vector<8x400xf32>
    %3 = tpu.matmul %2, %1, %cst {dimension_numbers = #tpu.dot_dimension_numbers<[1], [0], [0], [1], [0, 0, 1, 1], [], []>} : vector<8x22xbf16>, vector<22x400xbf16>, vector<8x400xf32> -> vector<8x400xf32>
    %c0_3 = arith.constant 0 : index
    %c0_4 = arith.constant 0 : index
    %4 = vector.load %arg3[%c0_3, %c0_4] : memref<3x400xf32, #tpu.memory_space<vmem>>, vector<3x400xf32>
    %5 = vector.extract_strided_slice %4 {offsets = [0, 0], sizes = [1, 400], strides = [1, 1]} : vector<3x400xf32> to vector<1x400xf32>
    %6 = vector.broadcast %5 : vector<1x400xf32> to vector<8x400xf32>
    %7 = arith.addf %3, %6 : vector<8x400xf32>
    %cst_5 = arith.constant dense<0.000000e+00> : vector<8xf32>
    %8 = vector.multi_reduction <add>, %7, %cst_5 [1] : vector<8x400xf32> to vector<8xf32>
    %9 = vector.shape_cast %8 : vector<8xf32> to vector<8x1xf32>
    %cst_6 = arith.constant 4.000000e+02 : f32
    %10 = vector.broadcast %cst_6 : f32 to vector<8x1xf32>
    %11 = arith.divf %9, %10 : vector<8x1xf32>
    %12 = vector.broadcast %11 : vector<8x1xf32> to vector<8x400xf32>
    %13 = arith.subf %7, %12 : vector<8x400xf32>
    %14 = arith.mulf %13, %13 : vector<8x400xf32>
    %cst_7 = arith.constant dense<0.000000e+00> : vector<8xf32>
    %15 = vector.multi_reduction <add>, %14, %cst_7 [1] : vector<8x400xf32> to vector<8xf32>
    %16 = vector.shape_cast %15 : vector<8xf32> to vector<8x1xf32>
    %cst_8 = arith.constant 4.000000e+02 : f32
    %17 = vector.broadcast %cst_8 : f32 to vector<8x1xf32>
    %18 = arith.divf %16, %17 : vector<8x1xf32>
    %cst_9 = arith.constant 9.99999974E-6 : f32
    %19 = vector.broadcast %cst_9 : f32 to vector<8x1xf32>
    %20 = arith.addf %18, %19 : vector<8x1xf32>
    %21 = math.rsqrt %20 : vector<8x1xf32>
    %22 = vector.broadcast %21 : vector<8x1xf32> to vector<8x400xf32>
    %23 = arith.mulf %13, %22 : vector<8x400xf32>
    %24 = vector.extract_strided_slice %4 {offsets = [1, 0], sizes = [1, 400], strides = [1, 1]} : vector<3x400xf32> to vector<1x400xf32>
    %25 = vector.broadcast %24 : vector<1x400xf32> to vector<8x400xf32>
    %26 = arith.mulf %23, %25 : vector<8x400xf32>
    %27 = vector.extract_strided_slice %4 {offsets = [2, 0], sizes = [1, 400], strides = [1, 1]} : vector<3x400xf32> to vector<1x400xf32>
    %28 = vector.broadcast %27 : vector<1x400xf32> to vector<8x400xf32>
    %29 = arith.addf %26, %28 : vector<8x400xf32>
    %cst_10 = arith.constant 0.000000e+00 : f32
    %30 = vector.broadcast %cst_10 : f32 to vector<8x400xf32>
    %31 = arith.maximumf %29, %30 : vector<8x400xf32>
    %c0_11 = arith.constant 0 : index
    %c0_12 = arith.constant 0 : index
    %32 = vector.load %arg4[%c0_11, %c0_12] : memref<400x300xbf16, #tpu.memory_space<vmem>>, vector<400x300xbf16>
    %33 = arith.truncf %31 : vector<8x400xf32> to vector<8x400xbf16>
    %cst_13 = arith.constant dense<0.000000e+00> : vector<8x300xf32>
    %34 = tpu.matmul %33, %32, %cst_13 {dimension_numbers = #tpu.dot_dimension_numbers<[1], [0], [0], [1], [0, 0, 1, 1], [], []>} : vector<8x400xbf16>, vector<400x300xbf16>, vector<8x300xf32> -> vector<8x300xf32>
    %c0_14 = arith.constant 0 : index
    %c0_15 = arith.constant 0 : index
    %35 = vector.load %arg5[%c0_14, %c0_15] : memref<3x300xf32, #tpu.memory_space<vmem>>, vector<3x300xf32>
    %36 = vector.extract_strided_slice %35 {offsets = [0, 0], sizes = [1, 300], strides = [1, 1]} : vector<3x300xf32> to vector<1x300xf32>
    %37 = vector.broadcast %36 : vector<1x300xf32> to vector<8x300xf32>
    %38 = arith.addf %34, %37 : vector<8x300xf32>
    %cst_16 = arith.constant dense<0.000000e+00> : vector<8xf32>
    %39 = vector.multi_reduction <add>, %38, %cst_16 [1] : vector<8x300xf32> to vector<8xf32>
    %40 = vector.shape_cast %39 : vector<8xf32> to vector<8x1xf32>
    %cst_17 = arith.constant 3.000000e+02 : f32
    %41 = vector.broadcast %cst_17 : f32 to vector<8x1xf32>
    %42 = arith.divf %40, %41 : vector<8x1xf32>
    %43 = vector.broadcast %42 : vector<8x1xf32> to vector<8x300xf32>
    %44 = arith.subf %38, %43 : vector<8x300xf32>
    %45 = arith.mulf %44, %44 : vector<8x300xf32>
    %cst_18 = arith.constant dense<0.000000e+00> : vector<8xf32>
    %46 = vector.multi_reduction <add>, %45, %cst_18 [1] : vector<8x300xf32> to vector<8xf32>
    %47 = vector.shape_cast %46 : vector<8xf32> to vector<8x1xf32>
    %cst_19 = arith.constant 3.000000e+02 : f32
    %48 = vector.broadcast %cst_19 : f32 to vector<8x1xf32>
    %49 = arith.divf %47, %48 : vector<8x1xf32>
    %cst_20 = arith.constant 9.99999974E-6 : f32
    %50 = vector.broadcast %cst_20 : f32 to vector<8x1xf32>
    %51 = arith.addf %49, %50 : vector<8x1xf32>
    %52 = math.rsqrt %51 : vector<8x1xf32>
    %53 = vector.broadcast %52 : vector<8x1xf32> to vector<8x300xf32>
    %54 = arith.mulf %44, %53 : vector<8x300xf32>
    %55 = vector.extract_strided_slice %35 {offsets = [1, 0], sizes = [1, 300], strides = [1, 1]} : vector<3x300xf32> to vector<1x300xf32>
    %56 = vector.broadcast %55 : vector<1x300xf32> to vector<8x300xf32>
    %57 = arith.mulf %54, %56 : vector<8x300xf32>
    %58 = vector.extract_strided_slice %35 {offsets = [2, 0], sizes = [1, 300], strides = [1, 1]} : vector<3x300xf32> to vector<1x300xf32>
    %59 = vector.broadcast %58 : vector<1x300xf32> to vector<8x300xf32>
    %60 = arith.addf %57, %59 : vector<8x300xf32>
    %cst_21 = arith.constant 0.000000e+00 : f32
    %61 = vector.broadcast %cst_21 : f32 to vector<8x300xf32>
    %62 = arith.maximumf %60, %61 : vector<8x300xf32>
    %c0_22 = arith.constant 0 : index
    %c0_23 = arith.constant 0 : index
    %63 = vector.load %arg6[%c0_22, %c0_23] : memref<300x200xbf16, #tpu.memory_space<vmem>>, vector<300x200xbf16>
    %64 = arith.truncf %62 : vector<8x300xf32> to vector<8x300xbf16>
    %cst_24 = arith.constant dense<0.000000e+00> : vector<8x200xf32>
    %65 = tpu.matmul %64, %63, %cst_24 {dimension_numbers = #tpu.dot_dimension_numbers<[1], [0], [0], [1], [0, 0, 1, 1], [], []>} : vector<8x300xbf16>, vector<300x200xbf16>, vector<8x200xf32> -> vector<8x200xf32>
    %c0_25 = arith.constant 0 : index
    %c0_26 = arith.constant 0 : index
    %66 = vector.load %arg7[%c0_25, %c0_26] : memref<3x200xf32, #tpu.memory_space<vmem>>, vector<3x200xf32>
    %67 = vector.extract_strided_slice %66 {offsets = [0, 0], sizes = [1, 200], strides = [1, 1]} : vector<3x200xf32> to vector<1x200xf32>
    %68 = vector.broadcast %67 : vector<1x200xf32> to vector<8x200xf32>
    %69 = arith.addf %65, %68 : vector<8x200xf32>
    %cst_27 = arith.constant dense<0.000000e+00> : vector<8xf32>
    %70 = vector.multi_reduction <add>, %69, %cst_27 [1] : vector<8x200xf32> to vector<8xf32>
    %71 = vector.shape_cast %70 : vector<8xf32> to vector<8x1xf32>
    %cst_28 = arith.constant 2.000000e+02 : f32
    %72 = vector.broadcast %cst_28 : f32 to vector<8x1xf32>
    %73 = arith.divf %71, %72 : vector<8x1xf32>
    %74 = vector.broadcast %73 : vector<8x1xf32> to vector<8x200xf32>
    %75 = arith.subf %69, %74 : vector<8x200xf32>
    %76 = arith.mulf %75, %75 : vector<8x200xf32>
    %cst_29 = arith.constant dense<0.000000e+00> : vector<8xf32>
    %77 = vector.multi_reduction <add>, %76, %cst_29 [1] : vector<8x200xf32> to vector<8xf32>
    %78 = vector.shape_cast %77 : vector<8xf32> to vector<8x1xf32>
    %cst_30 = arith.constant 2.000000e+02 : f32
    %79 = vector.broadcast %cst_30 : f32 to vector<8x1xf32>
    %80 = arith.divf %78, %79 : vector<8x1xf32>
    %cst_31 = arith.constant 9.99999974E-6 : f32
    %81 = vector.broadcast %cst_31 : f32 to vector<8x1xf32>
    %82 = arith.addf %80, %81 : vector<8x1xf32>
    %83 = math.rsqrt %82 : vector<8x1xf32>
    %84 = vector.broadcast %83 : vector<8x1xf32> to vector<8x200xf32>
    %85 = arith.mulf %75, %84 : vector<8x200xf32>
    %86 = vector.extract_strided_slice %66 {offsets = [1, 0], sizes = [1, 200], strides = [1, 1]} : vector<3x200xf32> to vector<1x200xf32>
    %87 = vector.broadcast %86 : vector<1x200xf32> to vector<8x200xf32>
    %88 = arith.mulf %85, %87 : vector<8x200xf32>
    %89 = vector.extract_strided_slice %66 {offsets = [2, 0], sizes = [1, 200], strides = [1, 1]} : vector<3x200xf32> to vector<1x200xf32>
    %90 = vector.broadcast %89 : vector<1x200xf32> to vector<8x200xf32>
    %91 = arith.addf %88, %90 : vector<8x200xf32>
    %cst_32 = arith.constant 0.000000e+00 : f32
    %92 = vector.broadcast %cst_32 : f32 to vector<8x200xf32>
    %93 = arith.maximumf %91, %92 : vector<8x200xf32>
    %c0_33 = arith.constant 0 : index
    %c0_34 = arith.constant 0 : index
    %94 = vector.load %arg8[%c0_33, %c0_34] : memref<200x128xbf16, #tpu.memory_space<vmem>>, vector<200x128xbf16>
    %95 = arith.truncf %93 : vector<8x200xf32> to vector<8x200xbf16>
    %cst_35 = arith.constant dense<0.000000e+00> : vector<8x128xf32>
    %96 = tpu.matmul %95, %94, %cst_35 {dimension_numbers = #tpu.dot_dimension_numbers<[1], [0], [0], [1], [0, 0, 1, 1], [], []>} : vector<8x200xbf16>, vector<200x128xbf16>, vector<8x128xf32> -> vector<8x128xf32>
    %c0_36 = arith.constant 0 : index
    %c0_37 = arith.constant 0 : index
    %97 = vector.load %arg9[%c0_36, %c0_37] : memref<1x128xf32, #tpu.memory_space<vmem>>, vector<1x128xf32>
    %98 = vector.broadcast %97 : vector<1x128xf32> to vector<8x128xf32>
    %99 = arith.addf %96, %98 : vector<8x128xf32>
    %100 = arith.negf %99 : vector<8x128xf32>
    %101 = math.exp %100 : vector<8x128xf32>
    %cst_38 = arith.constant 1.000000e+00 : f32
    %102 = vector.broadcast %cst_38 : f32 to vector<8x128xf32>
    %103 = arith.addf %102, %101 : vector<8x128xf32>
    %104 = arith.divf %102, %103 : vector<8x128xf32>
    %105 = arith.truncf %104 : vector<8x128xf32> to vector<8x128xbf16>
    %c0_39 = arith.constant 0 : index
    %c0_40 = arith.constant 0 : index
    %106 = vector.load %arg10[%c0_39, %c0_40] : memref<8x128xbf16, #tpu.memory_space<vmem>>, vector<8x128xbf16>
    tpu.vector_store %arg10[%c0_39, %c0_40], %105 {strides = array<i32>} : memref<8x128xbf16, #tpu.memory_space<vmem>>, vector<8x128xbf16>,
    return
  }
  func.func @transform_0(%arg0: i32) -> (i32, i32) {
    %c0_i32 = arith.constant 0 : i32
    %c0_i32_0 = arith.constant 0 : i32
    return %arg0, %c0_i32 : i32, i32
  }
  func.func @transform_1(%arg0: i32) -> (i32, i32) {
    %c0_i32 = arith.constant 0 : i32
    %c0_i32_0 = arith.constant 0 : i32
    %c0_i32_1 = arith.constant 0 : i32
    return %c0_i32, %c0_i32_0 : i32, i32
  }
  func.func @transform_2(%arg0: i32) -> (i32, i32) {
    %c0_i32 = arith.constant 0 : i32
    %c0_i32_0 = arith.constant 0 : i32
    %c0_i32_1 = arith.constant 0 : i32
    return %c0_i32, %c0_i32_0 : i32, i32
  }
  func.func @transform_3(%arg0: i32) -> (i32, i32) {
    %c0_i32 = arith.constant 0 : i32
    %c0_i32_0 = arith.constant 0 : i32
    %c0_i32_1 = arith.constant 0 : i32
    return %c0_i32, %c0_i32_0 : i32, i32
  }
  func.func @transform_4(%arg0: i32) -> (i32, i32) {
    %c0_i32 = arith.constant 0 : i32
    %c0_i32_0 = arith.constant 0 : i32
    %c0_i32_1 = arith.constant 0 : i32
    return %c0_i32, %c0_i32_0 : i32, i32
  }
  func.func @transform_5(%arg0: i32) -> (i32, i32) {
    %c0_i32 = arith.constant 0 : i32
    %c0_i32_0 = arith.constant 0 : i32
    %c0_i32_1 = arith.constant 0 : i32
    return %c0_i32, %c0_i32_0 : i32, i32
  }
  func.func @transform_6(%arg0: i32) -> (i32, i32) {
    %c0_i32 = arith.constant 0 : i32
    %c0_i32_0 = arith.constant 0 : i32
    %c0_i32_1 = arith.constant 0 : i32
    return %c0_i32, %c0_i32_0 : i32, i32
  }
  func.func @transform_7(%arg0: i32) -> (i32, i32) {
    %c0_i32 = arith.constant 0 : i32
    %c0_i32_0 = arith.constant 0 : i32
    %c0_i32_1 = arith.constant 0 : i32
    return %c0_i32, %c0_i32_0 : i32, i32
  }
  func.func @transform_8(%arg0: i32) -> (i32, i32) {
    %c0_i32 = arith.constant 0 : i32
    %c0_i32_0 = arith.constant 0 : i32
    %c0_i32_1 = arith.constant 0 : i32
    return %c0_i32, %c0_i32_0 : i32, i32
  }
  func.func @transform_9(%arg0: i32) -> (i32, i32) {
    %c0_i32 = arith.constant 0 : i32
    %c0_i32_0 = arith.constant 0 : i32
    return %arg0, %c0_i32 : i32, i32
  }
}

</mosaic_0001>

<llo_original>
// kernel: enhanced_actor_forward.1
$region0: #{enhanced_actor_forward.1}
  #allocation0 [shape = 'u32[]', space=smem, size = 0x4, offset = 0x4, fixed_abs, tag = 'smem constant byte address 0x4 - core index']
  #allocation1 [shape = 'u32[144,128]{1,0:T(1,128)}', space=vmem, size = 0x12000, scoped, tag = 'internal scratch']
  %s0 = inlined_call_operand.vmem [shape: f32[8,22], index: 0, kind: input, shape index: {}]
  %s1 = inlined_call_operand.hbm [shape: bf16[22,400], index: 1, kind: input, shape index: {}]
  %s2 = inlined_call_operand.vmem [shape: f32[3,400], index: 2, kind: input, shape index: {}]
  %s3 = inlined_call_operand.vmem [shape: bf16[400,300], index: 3, kind: input, shape index: {}]
  %s4 = inlined_call_operand.hbm [shape: f32[3,300], index: 4, kind: input, shape index: {}]
  %s5 = inlined_call_operand.vmem [shape: bf16[300,200], index: 5, kind: input, shape index: {}]
  %s6 = inlined_call_operand.hbm [shape: f32[3,200], index: 6, kind: input, shape index: {}]
  %s7 = inlined_call_operand.hbm [shape: bf16[200,128], index: 7, kind: input, shape index: {}]
  %s8 = inlined_call_operand.vmem [shape: f32[1,128], index: 8, kind: input, shape index: {}]
  %s9 = inlined_call_operand.vmem [shape: bf16[8,128], index: 9, kind: output, shape index: {}]
  %s10 = sld [smem:[#allocation0]]
  $region62: #{enhanced_actor_forward.1} parent=0
    _
  %s12 = ssub.s32 1, %s10
  %s13 = scalar_select 0, %s12, %s10
  $region1: #{enhanced_actor_forward.1} parent=0
    #allocation2 [shape = 'u8[24576]{0}', space=vmem, size = 0x6000, scoped, tag = 'input window, operand 1, single buffered']
    #allocation3 [shape = 's32[1]{0}', space=sflag, size = 0x4, scoped, tag = 'scoped memory for enhanced_actor_forward.1']
    #allocation4 [shape = 'u8[6144]{0}', space=vmem, size = 0x1800, scoped, tag = 'input window, operand 4, single buffered']
    #allocation5 [shape = 's32[1]{0}', space=sflag, size = 0x4, scoped, tag = 'scoped memory for enhanced_actor_forward.1']
    #allocation6 [shape = 'u8[4096]{0}', space=vmem, size = 0x1000, scoped, tag = 'input window, operand 6, single buffered']
    #allocation7 [shape = 'u8[51200]{0}', space=vmem, size = 0xc800, scoped, tag = 'input window, operand 7, single buffered']
    #allocation8 [shape = 's32[1]{0}', space=sflag, size = 0x4, scoped, tag = 'scoped memory for enhanced_actor_forward.1']
    %14 = vsyncpa [#allocation3], 0
    %15 = vsyncpa [#allocation5], 0
    %16 = vsyncpa [#allocation8], 0
    // Predicated region
    $region2: #{enhanced_actor_forward.1} parent=1 // pred_check
      _
    $region3: #{enhanced_actor_forward.1} parent=1 // pred_check_branch
      %18 = sbr.rel (0) target = $region5
    $region4: #{enhanced_actor_forward.1} parent=1 // pred_region
      _
    $region5: #{enhanced_actor_forward.1} parent=1 // pred_fallthru
      _
    // Predicated region
    $region6: #{enhanced_actor_forward.1} parent=1 // pred_check
      _
    $region7: #{enhanced_actor_forward.1} parent=1 // pred_check_branch
      %20 = sbr.rel (0) target = $region9
    $region8: #{enhanced_actor_forward.1} parent=1 // pred_region
      %s22 = ssub.s32 768, 768
      %23 = vsyncadd [#allocation3], %s22
      %s24 = sshll.u32 [#allocation2], 4
      %s25 = int_to_ptr.vmem [resolvable:$true] %s24
      %30 = dma.hbm_to_vmem [thread:$0]  %s1, 768, %s25, [#allocation3], 256, 256, 16
    $region9: #{enhanced_actor_forward.1} parent=1 // pred_fallthru
      _
    // Predicated region
    $region10: #{enhanced_actor_forward.1} parent=1 // pred_check
      _
    $region11: #{enhanced_actor_forward.1} parent=1 // pred_check_branch
      %32 = sbr.rel (0) target = $region13
    $region12: #{enhanced_actor_forward.1} parent=1 // pred_region
      _
    $region13: #{enhanced_actor_forward.1} parent=1 // pred_fallthru
      _
    // Predicated region
    $region14: #{enhanced_actor_forward.1} parent=1 // pred_check
      _
    $region15: #{enhanced_actor_forward.1} parent=1 // pred_check_branch
      %34 = sbr.rel (0) target = $region17
    $region16: #{enhanced_actor_forward.1} parent=1 // pred_region
      _
    $region17: #{enhanced_actor_forward.1} parent=1 // pred_fallthru
      _
    // Predicated region
    $region18: #{enhanced_actor_forward.1} parent=1 // pred_check
      _
    $region19: #{enhanced_actor_forward.1} parent=1 // pred_check_branch
      %36 = sbr.rel (0) target = $region21
    $region20: #{enhanced_actor_forward.1} parent=1 // pred_region
      %s38 = ssub.s32 192, 192
      %39 = vsyncadd [#allocation5], %s38
      %s41 = sshll.u32 [#allocation4], 4
      %s42 = int_to_ptr.vmem [resolvable:$true] %s41
      %44 = dma.hbm_to_vmem [thread:$0]  %s4, 192, %s42, [#allocation5]
    $region21: #{enhanced_actor_forward.1} parent=1 // pred_fallthru
      _
    // Predicated region
    $region22: #{enhanced_actor_forward.1} parent=1 // pred_check
      _
    $region23: #{enhanced_actor_forward.1} parent=1 // pred_check_branch
      %46 = sbr.rel (0) target = $region25
    $region24: #{enhanced_actor_forward.1} parent=1 // pred_region
      _
    $region25: #{enhanced_actor_forward.1} parent=1 // pred_fallthru
      _
    // Predicated region
    $region26: #{enhanced_actor_forward.1} parent=1 // pred_check
      _
    $region27: #{enhanced_actor_forward.1} parent=1 // pred_check_branch
      %48 = sbr.rel (0) target = $region29
    $region28: #{enhanced_actor_forward.1} parent=1 // pred_region
      %s50 = ssub.s32 128, 128
      %51 = vsyncadd [#allocation5], %s50
      %s53 = sshll.u32 [#allocation6], 4
      %s54 = int_to_ptr.vmem [resolvable:$true] %s53
      %56 = dma.hbm_to_vmem [thread:$0]  %s6, 128, %s54, [#allocation5]
    $region29: #{enhanced_actor_forward.1} parent=1 // pred_fallthru
      _
    // Predicated region
    $region30: #{enhanced_actor_forward.1} parent=1 // pred_check
      _
    $region31: #{enhanced_actor_forward.1} parent=1 // pred_check_branch
      %58 = sbr.rel (0) target = $region33
    $region32: #{enhanced_actor_forward.1} parent=1 // pred_region
      %s60 = ssub.s32 1600, 1600
      %61 = vsyncadd [#allocation8], %s60
      %s62 = sshll.u32 [#allocation7], 4
      %s63 = int_to_ptr.vmem [resolvable:$true] %s62
      %68 = dma.hbm_to_vmem [thread:$0]  %s7, 1600, %s63, [#allocation8], 64, 64, 4
    $region33: #{enhanced_actor_forward.1} parent=1 // pred_fallthru
      _
    // Predicated region
    $region34: #{enhanced_actor_forward.1} parent=1 // pred_check
      _
    $region35: #{enhanced_actor_forward.1} parent=1 // pred_check_branch
      %70 = sbr.rel (0) target = $region37
    $region36: #{enhanced_actor_forward.1} parent=1 // pred_region
      _
    $region37: #{enhanced_actor_forward.1} parent=1 // pred_fallthru
      _
    // Predicated region
    $region38: #{enhanced_actor_forward.1} parent=1 // pred_check
      _
    $region39: #{enhanced_actor_forward.1} parent=1 // pred_check_branch
      %72 = sbr.rel (0) target = $region41
    $region40: #{enhanced_actor_forward.1} parent=1 // pred_region
      %73 = dma.done [#allocation3], 768
    $region41: #{enhanced_actor_forward.1} parent=1 // pred_fallthru
      _
    // Predicated region
    $region42: #{enhanced_actor_forward.1} parent=1 // pred_check
      _
    $region43: #{enhanced_actor_forward.1} parent=1 // pred_check_branch
      %75 = sbr.rel (0) target = $region45
    $region44: #{enhanced_actor_forward.1} parent=1 // pred_region
      %76 = dma.done [#allocation5], 192
    $region45: #{enhanced_actor_forward.1} parent=1 // pred_fallthru
      _
    // Predicated region
    $region46: #{enhanced_actor_forward.1} parent=1 // pred_check
      _
    $region47: #{enhanced_actor_forward.1} parent=1 // pred_check_branch
      %78 = sbr.rel (0) target = $region49
    $region48: #{enhanced_actor_forward.1} parent=1 // pred_region
      %79 = dma.done [#allocation5], 128
    $region49: #{enhanced_actor_forward.1} parent=1 // pred_fallthru
      _
    // Predicated region
    $region50: #{enhanced_actor_forward.1} parent=1 // pred_check
      _
    $region51: #{enhanced_actor_forward.1} parent=1 // pred_check_branch
      %81 = sbr.rel (0) target = $region53
    $region52: #{enhanced_actor_forward.1} parent=1 // pred_region
      %82 = dma.done [#allocation8], 1600
    $region53: #{enhanced_actor_forward.1} parent=1 // pred_fallthru
      _
    %v84 = vld [vmem:[%s0] sm:$0xff]
    %v85 = vld [vmem:[#allocation2] sm:$0xff]
    %v86 = vld [vmem:[#allocation2 + $0x8] sm:$0xff]
    %v87 = vld [vmem:[#allocation2 + $0x10] sm:$0xff]
    %v88 = vld [vmem:[#allocation2 + $0x18] sm:$0xff]
    %v89 = vld [vmem:[#allocation2 + $0x20] sm:$0x77]
    %v90 = vld [vmem:[#allocation2 + $0x28] sm:$0x77]
    %v91 = vpack.c.bf16 %v84, %v84
    %v92 = vld [vmem:[%s2] sm:$0x77]
    %v93 = vld [vmem:[%s2 + $0x8] sm:$0x77]
    %v96 = vlaneseq
    %v97 = vshrl.u32 %v96, 7
    %v98 = vsub.s32 0, %v97
    %v99 = vrot.slane %v92, %v98
    %v100 = vlaneseq
    %v101 = vshrl.u32 %v100, 7
    %v102 = vsub.s32 4, %v101
    %v103 = vrot.slane %v92, %v102
    %v104 = vlaneseq
    %v105 = vshrl.u32 %v104, 7
    %v106 = vsub.s32 0, %v105
    %v107 = vrot.slane %v93, %v106
    %v108 = vlaneseq
    %v109 = vshrl.u32 %v108, 7
    %v110 = vsub.s32 4, %v109
    %v111 = vrot.slane %v93, %v110
    %v116 = vlaneseq
    %v117 = vshrl.u32 %v116, 7
    %v118 = vsub.s32 0, %v117
    %v119 = vrot.slane %v99, %v118
    %v120 = vlaneseq
    %v121 = vshrl.u32 %v120, 7
    %v122 = vsub.s32 0, %v121
    %v123 = vrot.slane %v103, %v122
    %v124 = vlaneseq
    %v125 = vshrl.u32 %v124, 7
    %v126 = vsub.s32 0, %v125
    %v127 = vrot.slane %v107, %v126
    %v128 = vlaneseq
    %v129 = vshrl.u32 %v128, 7
    %v130 = vsub.s32 0, %v129
    %v131 = vrot.slane %v111, %v130
    %v138 = vunpack.c.l.b16 %v85
    %v139 = vunpack.c.h.b16 %v85
    %v140 = vunpack.c.l.b16 %v86
    %v141 = vunpack.c.h.b16 %v86
    %v142 = vunpack.c.l.b16 %v87
    %v143 = vunpack.c.h.b16 %v87
    %v144 = vunpack.c.l.b16 %v88
    %v145 = vunpack.c.h.b16 %v88
    %v146 = vunpack.c.l.b16 %v89
    %v147 = vunpack.c.h.b16 %v89
    %v148 = vunpack.c.l.b16 %v90
    %v149 = vunpack.c.h.b16 %v90
    %v150 = vpack.c.b16 %v142, %v138
    %v151 = vpack.c.b16 %v143, %v139
    %v152 = vpack.c.b16 %v144, %v140
    %v153 = vpack.c.b16 %v145, %v141
    %v154 = vpack.c.b16 %v146, %v146
    %v155 = vpack.c.b16 %v147, %v147
    %v156 = vpack.c.b16 %v148, %v148
    %v157 = vpack.c.b16 %v149, %v149
    %vm162 = vcmask 179200
    %v164 = vsel %vm162, %v91, 0
    %vm166 = vcmask 1042432
    %v168 = vsel %vm166, %v154, 0
    %v171 = vsel %vm166, %v155, 0
    %v174 = vsel %vm166, %v156, 0
    %v177 = vsel %vm166, %v157, 0
    %179 = vmatprep.subr.bf16.mxu0 %v151
    %180 = vmatpush1.bf16.msra.mxu0 %v150
    %181 = vmatprep.subr.bf16.mxu0 %v171
    %182 = vmatpush1.bf16.msra.mxu0 %v168
    %183 = vmatprep.subr.bf16.mxu0 0
    %184 = vmatpush1.bf16.msra.mxu0 0
    %185 = vmatprep.subr.bf16.mxu0 0
    %186 = vmatpush1.bf16.msra.mxu0 0
    %187 = vmatprep.subr.bf16.mxu0 0
    %188 = vmatpush1.bf16.msra.mxu0 0
    %189 = vmatprep.subr.bf16.mxu0 0
    %190 = vmatpush1.bf16.msra.mxu0 0
    %191 = vmatprep.subr.bf16.mxu0 0
    %192 = vmatpush1.bf16.msra.mxu0 0
    %193 = vmatprep.subr.bf16.mxu0 0
    %194 = vmatpush1.bf16.msra.mxu0 0
    %195 = vmatprep.subr.bf16.mxu0 0
    %196 = vmatpush1.bf16.msra.mxu0 0
    %197 = vmatprep.subr.bf16.mxu0 0
    %198 = vmatpush1.bf16.msra.mxu0 0
    %199 = vmatprep.subr.bf16.mxu0 0
    %200 = vmatpush1.bf16.msra.mxu0 0
    %201 = vmatprep.subr.bf16.mxu0 0
    %202 = vmatpush1.bf16.msra.mxu0 0
    %203 = vmatprep.subr.bf16.mxu0 0
    %204 = vmatpush1.bf16.msra.mxu0 0
    %205 = vmatprep.subr.bf16.mxu0 0
    %206 = vmatpush1.bf16.msra.mxu0 0
    %207 = vmatprep.subr.bf16.mxu0 0
    %208 = vmatpush1.bf16.msra.mxu0 0
    %209 = vmatprep.subr.bf16.mxu0 0
    %210 = vmatpush1.bf16.msra.mxu0 0
    %211 = vmatprep.mubr.bf16.mxu0 0
    %212 = vmatmul.mubr.bf16.gmra.mrb[0].mxu0 %v164
    %v213 = vpop.f32.mrb[0].mxu0
    %v214 = vadd.f32 %v119, %v213
    %v215 = vpop.f32.mrb[0].mxu0
    %v216 = vadd.f32 %v123, %v215
    %v217 = vpop.f32.mrb[0].mxu0
    %v218 = vpop.f32.mrb[0].mxu0
    %219 = vdwg.mxu0
    %220 = vmatprep.subr.bf16.mxu0 %v153
    %221 = vmatpush1.bf16.msra.mxu0 %v152
    %222 = vmatprep.subr.bf16.mxu0 %v177
    %223 = vmatpush1.bf16.msra.mxu0 %v174
    %224 = vmatprep.subr.bf16.mxu0 0
    %225 = vmatpush1.bf16.msra.mxu0 0
    %226 = vmatprep.subr.bf16.mxu0 0
    %227 = vmatpush1.bf16.msra.mxu0 0
    %228 = vmatprep.subr.bf16.mxu0 0
    %229 = vmatpush1.bf16.msra.mxu0 0
    %230 = vmatprep.subr.bf16.mxu0 0
    %231 = vmatpush1.bf16.msra.mxu0 0
    %232 = vmatprep.subr.bf16.mxu0 0
    %233 = vmatpush1.bf16.msra.mxu0 0
    %234 = vmatprep.subr.bf16.mxu0 0
    %235 = vmatpush1.bf16.msra.mxu0 0
    %236 = vmatprep.subr.bf16.mxu0 0
    %237 = vmatpush1.bf16.msra.mxu0 0
    %238 = vmatprep.subr.bf16.mxu0 0
    %239 = vmatpush1.bf16.msra.mxu0 0
    %240 = vmatprep.subr.bf16.mxu0 0
    %241 = vmatpush1.bf16.msra.mxu0 0
    %242 = vmatprep.subr.bf16.mxu0 0
    %243 = vmatpush1.bf16.msra.mxu0 0
    %244 = vmatprep.subr.bf16.mxu0 0
    %245 = vmatpush1.bf16.msra.mxu0 0
    %246 = vmatprep.subr.bf16.mxu0 0
    %247 = vmatpush1.bf16.msra.mxu0 0
    %248 = vmatprep.subr.bf16.mxu0 0
    %249 = vmatpush1.bf16.msra.mxu0 0
    %250 = vmatprep.subr.bf16.mxu0 0
    %251 = vmatpush1.bf16.msra.mxu0 0
    %252 = vmatprep.mubr.bf16.mxu0 0
    %253 = vmatmul.mubr.bf16.gmra.mrb[0].mxu0 %v164
    %v254 = vpop.f32.mrb[0].mxu0
    %v255 = vadd.f32 %v127, %v254
    %v256 = vpop.f32.mrb[0].mxu0
    %v257 = vadd.f32 %v131, %v256
    %v258 = vpop.f32.mrb[0].mxu0
    %v259 = vpop.f32.mrb[0].mxu0
    %260 = vdwg.mxu0
    %v261 = vadd.f32 %v214, %v216
    %v262 = vadd.f32 %v261, %v255
    %vm263 = vcmask 130048
    %v264 = vsel %vm263, %v257, 0.0
    %v265 = vadd.f32 %v262, %v264
    %266 = vadd.xlane.f32.xlu0 %v265
    %v267 = vpop.xlane.xlu0 %266
    %v268 = vrcp.pop 400.0
    %v269 = vmul.f32 %v267, %v268
    %v270 = vsub.f32 %v214, %v269
    %v271 = vsub.f32 %v216, %v269
    %v272 = vsub.f32 %v255, %v269
    %v273 = vsub.f32 %v257, %v269
    %v274 = vmul.f32 %v270, %v270
    %v275 = vmul.f32 %v271, %v271
    %v276 = vmul.f32 %v272, %v272
    %v277 = vmul.f32 %v273, %v273
    %v278 = vadd.f32 %v274, %v275
    %v279 = vadd.f32 %v278, %v276
    %v280 = vsel %vm263, %v277, 0.0
    %v281 = vadd.f32 %v279, %v280
    %282 = vadd.xlane.f32.xlu0 %v281
    %v283 = vpop.xlane.xlu0 %282
    %v284 = vmul.f32 %v283, %v268
    %v285 = vadd.f32 %v284, 1e-05
    %v286 = vrsqrt.pop %v285
    %v287 = vmul.f32 %v270, %v286
    %v288 = vmul.f32 %v271, %v286
    %v289 = vmul.f32 %v272, %v286
    %v290 = vmul.f32 %v273, %v286
    %v291 = vlaneseq
    %v292 = vshrl.u32 %v291, 7
    %v293 = vsub.s32 1, %v292
    %v294 = vrot.slane %v92, %v293
    %v295 = vlaneseq
    %v296 = vshrl.u32 %v295, 7
    %v297 = vsub.s32 5, %v296
    %v298 = vrot.slane %v92, %v297
    %v299 = vlaneseq
    %v300 = vshrl.u32 %v299, 7
    %v301 = vsub.s32 1, %v300
    %v302 = vrot.slane %v93, %v301
    %v303 = vlaneseq
    %v304 = vshrl.u32 %v303, 7
    %v305 = vsub.s32 5, %v304
    %v306 = vrot.slane %v93, %v305
    %v311 = vlaneseq
    %v312 = vshrl.u32 %v311, 7
    %v313 = vsub.s32 1, %v312
    %v314 = vrot.slane %v294, %v313
    %v315 = vlaneseq
    %v316 = vshrl.u32 %v315, 7
    %v317 = vsub.s32 1, %v316
    %v318 = vrot.slane %v298, %v317
    %v319 = vlaneseq
    %v320 = vshrl.u32 %v319, 7
    %v321 = vsub.s32 1, %v320
    %v322 = vrot.slane %v302, %v321
    %v323 = vlaneseq
    %v324 = vshrl.u32 %v323, 7
    %v325 = vsub.s32 1, %v324
    %v326 = vrot.slane %v306, %v325
    %v327 = vmul.f32 %v287, %v314
    %v328 = vmul.f32 %v288, %v318
    %v329 = vmul.f32 %v289, %v322
    %v330 = vmul.f32 %v290, %v326
    %v331 = vlaneseq
    %v332 = vshrl.u32 %v331, 7
    %v333 = vsub.s32 2, %v332
    %v334 = vrot.slane %v92, %v333
    %v335 = vlaneseq
    %v336 = vshrl.u32 %v335, 7
    %v337 = vsub.s32 6, %v336
    %v338 = vrot.slane %v92, %v337
    %v339 = vlaneseq
    %v340 = vshrl.u32 %v339, 7
    %v341 = vsub.s32 2, %v340
    %v342 = vrot.slane %v93, %v341
    %v343 = vlaneseq
    %v344 = vshrl.u32 %v343, 7
    %v345 = vsub.s32 6, %v344
    %v346 = vrot.slane %v93, %v345
    %v351 = vlaneseq
    %v352 = vshrl.u32 %v351, 7
    %v353 = vsub.s32 2, %v352
    %v354 = vrot.slane %v334, %v353
    %v355 = vlaneseq
    %v356 = vshrl.u32 %v355, 7
    %v357 = vsub.s32 2, %v356
    %v358 = vrot.slane %v338, %v357
    %v359 = vlaneseq
    %v360 = vshrl.u32 %v359, 7
    %v361 = vsub.s32 2, %v360
    %v362 = vrot.slane %v342, %v361
    %v363 = vlaneseq
    %v364 = vshrl.u32 %v363, 7
    %v365 = vsub.s32 2, %v364
    %v366 = vrot.slane %v346, %v365
    %v367 = vadd.f32 %v327, %v354
    %v368 = vadd.f32 %v328, %v358
    %v369 = vadd.f32 %v329, %v362
    %v370 = vadd.f32 %v330, %v366
    %v371 = vmax.f32 %v367, 0.0
    %v372 = vmax.f32 %v368, 0.0
    %v373 = vmax.f32 %v369, 0.0
    %v374 = vmax.f32 %v370, 0.0
    %v375 = vld [vmem:[%s3] sm:$0xff]
    %v376 = vld [vmem:[%s3 + $0x8] sm:$0xf]
    %v377 = vld [vmem:[%s3 + $0xc] sm:$0xff]
    %v378 = vld [vmem:[%s3 + $0x14] sm:$0xf]
    %v379 = vld [vmem:[%s3 + $0x18] sm:$0xff]
    %v380 = vld [vmem:[%s3 + $0x20] sm:$0xf]
    %v381 = vld [vmem:[%s3 + $0x24] sm:$0xff]
    %v382 = vld [vmem:[%s3 + $0x2c] sm:$0xf]
    %v383 = vld [vmem:[%s3 + $0x30] sm:$0xff]
    %v384 = vld [vmem:[%s3 + $0x38] sm:$0xf]
    %v385 = vld [vmem:[%s3 + $0x3c] sm:$0xff]
    %v386 = vld [vmem:[%s3 + $0x44] sm:$0xf]
    %v387 = vld [vmem:[%s3 + $0x48] sm:$0xff]
    %v388 = vld [vmem:[%s3 + $0x50] sm:$0xf]
    %v389 = vld [vmem:[%s3 + $0x54] sm:$0xff]
    %v390 = vld [vmem:[%s3 + $0x5c] sm:$0xf]
    %v391 = vld [vmem:[%s3 + $0x60] sm:$0xff]
    %v392 = vld [vmem:[%s3 + $0x68] sm:$0xf]
    %v393 = vld [vmem:[%s3 + $0x6c] sm:$0xff]
    %v394 = vld [vmem:[%s3 + $0x74] sm:$0xf]
    %v395 = vld [vmem:[%s3 + $0x78] sm:$0xff]
    %v396 = vld [vmem:[%s3 + $0x80] sm:$0xf]
    %v397 = vld [vmem:[%s3 + $0x84] sm:$0xff]
    %v398 = vld [vmem:[%s3 + $0x8c] sm:$0xf]
    %v399 = vld [vmem:[%s3 + $0x90] sm:$0xff]
    %v400 = vld [vmem:[%s3 + $0x98] sm:$0xf]
    %v401 = vld [vmem:[%s3 + $0x9c] sm:$0xff]
    %v402 = vld [vmem:[%s3 + $0xa4] sm:$0xf]
    %v403 = vld [vmem:[%s3 + $0xa8] sm:$0xff]
    %v404 = vld [vmem:[%s3 + $0xb0] sm:$0xf]
    %v405 = vld [vmem:[%s3 + $0xb4] sm:$0xff]
    %v406 = vld [vmem:[%s3 + $0xbc] sm:$0xf]
    %v407 = vld [vmem:[%s3 + $0xc0] sm:$0xff]
    %v408 = vld [vmem:[%s3 + $0xc8] sm:$0xf]
    %v409 = vld [vmem:[%s3 + $0xcc] sm:$0xff]
    %v410 = vld [vmem:[%s3 + $0xd4] sm:$0xf]
    %v411 = vld [vmem:[%s3 + $0xd8] sm:$0xff]
    %v412 = vld [vmem:[%s3 + $0xe0] sm:$0xf]
    %v413 = vld [vmem:[%s3 + $0xe4] sm:$0xff]
    %v414 = vld [vmem:[%s3 + $0xec] sm:$0xf]
    %v415 = vld [vmem:[%s3 + $0xf0] sm:$0xff]
    %v416 = vld [vmem:[%s3 + $0xf8] sm:$0xf]
    %v417 = vld [vmem:[%s3 + $0xfc] sm:$0xff]
    %v418 = vld [vmem:[%s3 + $0x104] sm:$0xf]
    %v419 = vld [vmem:[%s3 + $0x108] sm:$0xff]
    %v420 = vld [vmem:[%s3 + $0x110] sm:$0xf]
    %v421 = vld [vmem:[%s3 + $0x114] sm:$0xff]
    %v422 = vld [vmem:[%s3 + $0x11c] sm:$0xf]
    %v423 = vld [vmem:[%s3 + $0x120] sm:$0xff]
    %v424 = vld [vmem:[%s3 + $0x128] sm:$0xf]
    %v425 = vld [vmem:[%s3 + $0x12c] sm:$0xff]
    %v426 = vld [vmem:[%s3 + $0x134] sm:$0xf]
    %v427 = vld [vmem:[%s3 + $0x138] sm:$0xff]
    %v428 = vld [vmem:[%s3 + $0x140] sm:$0xf]
    %v429 = vld [vmem:[%s3 + $0x144] sm:$0xff]
    %v430 = vld [vmem:[%s3 + $0x14c] sm:$0xf]
    %v431 = vld [vmem:[%s3 + $0x150] sm:$0xff]
    %v432 = vld [vmem:[%s3 + $0x158] sm:$0xf]
    %v433 = vld [vmem:[%s3 + $0x15c] sm:$0xff]
    %v434 = vld [vmem:[%s3 + $0x164] sm:$0xf]
    %v435 = vld [vmem:[%s3 + $0x168] sm:$0xff]
    %v436 = vld [vmem:[%s3 + $0x170] sm:$0xf]
    %v437 = vld [vmem:[%s3 + $0x174] sm:$0xff]
    %v438 = vld [vmem:[%s3 + $0x17c] sm:$0xf]
    %v439 = vld [vmem:[%s3 + $0x180] sm:$0xff]
    %v440 = vld [vmem:[%s3 + $0x188] sm:$0xf]
    %v441 = vld [vmem:[%s3 + $0x18c] sm:$0xff]
    %v442 = vld [vmem:[%s3 + $0x194] sm:$0xf]
    %v443 = vld [vmem:[%s3 + $0x198] sm:$0xff]
    %v444 = vld [vmem:[%s3 + $0x1a0] sm:$0xf]
    %v445 = vld [vmem:[%s3 + $0x1a4] sm:$0xff]
    %v446 = vld [vmem:[%s3 + $0x1ac] sm:$0xf]
    %v447 = vld [vmem:[%s3 + $0x1b0] sm:$0xff]
    %v448 = vld [vmem:[%s3 + $0x1b8] sm:$0xf]
    %v449 = vld [vmem:[%s3 + $0x1bc] sm:$0xff]
    %v450 = vld [vmem:[%s3 + $0x1c4] sm:$0xf]
    %v451 = vld [vmem:[%s3 + $0x1c8] sm:$0xff]
    %v452 = vld [vmem:[%s3 + $0x1d0] sm:$0xf]
    %v453 = vld [vmem:[%s3 + $0x1d4] sm:$0xff]
    %v454 = vld [vmem:[%s3 + $0x1dc] sm:$0xf]
    %v455 = vld [vmem:[%s3 + $0x1e0] sm:$0xff]
    %v456 = vld [vmem:[%s3 + $0x1e8] sm:$0xf]
    %v457 = vld [vmem:[%s3 + $0x1ec] sm:$0xff]
    %v458 = vld [vmem:[%s3 + $0x1f4] sm:$0xf]
    %v459 = vld [vmem:[%s3 + $0x1f8] sm:$0xff]
    %v460 = vld [vmem:[%s3 + $0x200] sm:$0xf]
    %v461 = vld [vmem:[%s3 + $0x204] sm:$0xff]
    %v462 = vld [vmem:[%s3 + $0x20c] sm:$0xf]
    %v463 = vld [vmem:[%s3 + $0x210] sm:$0xff]
    %v464 = vld [vmem:[%s3 + $0x218] sm:$0xf]
    %v465 = vld [vmem:[%s3 + $0x21c] sm:$0xff]
    %v466 = vld [vmem:[%s3 + $0x224] sm:$0xf]
    %v467 = vld [vmem:[%s3 + $0x228] sm:$0xff]
    %v468 = vld [vmem:[%s3 + $0x230] sm:$0xf]
    %v469 = vld [vmem:[%s3 + $0x234] sm:$0xff]
    %v470 = vld [vmem:[%s3 + $0x23c] sm:$0xf]
    %v471 = vld [vmem:[%s3 + $0x240] sm:$0xff]
    %v472 = vld [vmem:[%s3 + $0x248] sm:$0xf]
    %v473 = vld [vmem:[%s3 + $0x24c] sm:$0xff]
    %v474 = vld [vmem:[%s3 + $0x254] sm:$0xf]
    %v475 = vpack.c.bf16 %v371, %v371
    %v476 = vpack.c.bf16 %v372, %v372
    %v477 = vpack.c.bf16 %v373, %v373
    %v478 = vpack.c.bf16 %v374, %v374
    %v479 = vld [vmem:[#allocation4] sm:$0x77]
    %v480 = vld [vmem:[#allocation4 + $0x8] sm:$0x7]
    %v483 = vlaneseq
    %v484 = vshrl.u32 %v483, 7
    %v485 = vsub.s32 0, %v484
    %v486 = vrot.slane %v479, %v485
    %v487 = vlaneseq
    %v488 = vshrl.u32 %v487, 7
    %v489 = vsub.s32 4, %v488
    %v490 = vrot.slane %v479, %v489
    %v491 = vlaneseq
    %v492 = vshrl.u32 %v491, 7
    %v493 = vsub.s32 0, %v492
    %v494 = vrot.slane %v480, %v493
    %v498 = vlaneseq
    %v499 = vshrl.u32 %v498, 7
    %v500 = vsub.s32 0, %v499
    %v501 = vrot.slane %v486, %v500
    %v502 = vlaneseq
    %v503 = vshrl.u32 %v502, 7
    %v504 = vsub.s32 0, %v503
    %v505 = vrot.slane %v490, %v504
    %v506 = vlaneseq
    %v507 = vshrl.u32 %v506, 7
    %v508 = vsub.s32 0, %v507
    %v509 = vrot.slane %v494, %v508
    %v610 = vunpack.c.l.b16 %v375
    %v611 = vunpack.c.h.b16 %v375
    %v612 = vunpack.c.l.b16 %v376
    %v613 = vunpack.c.l.b16 %v377
    %v614 = vunpack.c.h.b16 %v377
    %v615 = vunpack.c.l.b16 %v378
    %v616 = vunpack.c.l.b16 %v379
    %v617 = vunpack.c.h.b16 %v379
    %v618 = vunpack.c.l.b16 %v380
    %v619 = vunpack.c.l.b16 %v381
    %v620 = vunpack.c.h.b16 %v381
    %v621 = vunpack.c.l.b16 %v382
    %v622 = vunpack.c.l.b16 %v383
    %v623 = vunpack.c.h.b16 %v383
    %v624 = vunpack.c.l.b16 %v384
    %v625 = vunpack.c.l.b16 %v385
    %v626 = vunpack.c.h.b16 %v385
    %v627 = vunpack.c.l.b16 %v386
    %v628 = vunpack.c.l.b16 %v387
    %v629 = vunpack.c.h.b16 %v387
    %v630 = vunpack.c.l.b16 %v388
    %v631 = vunpack.c.l.b16 %v389
    %v632 = vunpack.c.h.b16 %v389
    %v633 = vunpack.c.l.b16 %v390
    %v634 = vunpack.c.l.b16 %v391
    %v635 = vunpack.c.h.b16 %v391
    %v636 = vunpack.c.l.b16 %v392
    %v637 = vunpack.c.l.b16 %v393
    %v638 = vunpack.c.h.b16 %v393
    %v639 = vunpack.c.l.b16 %v394
    %v640 = vunpack.c.l.b16 %v395
    %v641 = vunpack.c.h.b16 %v395
    %v642 = vunpack.c.l.b16 %v396
    %v643 = vunpack.c.l.b16 %v397
    %v644 = vunpack.c.h.b16 %v397
    %v645 = vunpack.c.l.b16 %v398
    %v646 = vunpack.c.l.b16 %v399
    %v647 = vunpack.c.h.b16 %v399
    %v648 = vunpack.c.l.b16 %v400
    %v649 = vunpack.c.l.b16 %v401
    %v650 = vunpack.c.h.b16 %v401
    %v651 = vunpack.c.l.b16 %v402
    %v652 = vunpack.c.l.b16 %v403
    %v653 = vunpack.c.h.b16 %v403
    %v654 = vunpack.c.l.b16 %v404
    %v655 = vunpack.c.l.b16 %v405
    %v656 = vunpack.c.h.b16 %v405
    %v657 = vunpack.c.l.b16 %v406
    %v658 = vunpack.c.l.b16 %v407
    %v659 = vunpack.c.h.b16 %v407
    %v660 = vunpack.c.l.b16 %v408
    %v661 = vunpack.c.l.b16 %v409
    %v662 = vunpack.c.h.b16 %v409
    %v663 = vunpack.c.l.b16 %v410
    %v664 = vunpack.c.l.b16 %v411
    %v665 = vunpack.c.h.b16 %v411
    %v666 = vunpack.c.l.b16 %v412
    %v667 = vunpack.c.l.b16 %v413
    %v668 = vunpack.c.h.b16 %v413
    %v669 = vunpack.c.l.b16 %v414
    %v670 = vunpack.c.l.b16 %v415
    %v671 = vunpack.c.h.b16 %v415
    %v672 = vunpack.c.l.b16 %v416
    %v673 = vunpack.c.l.b16 %v417
    %v674 = vunpack.c.h.b16 %v417
    %v675 = vunpack.c.l.b16 %v418
    %v676 = vunpack.c.l.b16 %v419
    %v677 = vunpack.c.h.b16 %v419
    %v678 = vunpack.c.l.b16 %v420
    %v679 = vunpack.c.l.b16 %v421
    %v680 = vunpack.c.h.b16 %v421
    %v681 = vunpack.c.l.b16 %v422
    %v682 = vunpack.c.l.b16 %v423
    %v683 = vunpack.c.h.b16 %v423
    %v684 = vunpack.c.l.b16 %v424
    %v685 = vunpack.c.l.b16 %v425
    %v686 = vunpack.c.h.b16 %v425
    %v687 = vunpack.c.l.b16 %v426
    %v688 = vunpack.c.l.b16 %v427
    %v689 = vunpack.c.h.b16 %v427
    %v690 = vunpack.c.l.b16 %v428
    %v691 = vunpack.c.l.b16 %v429
    %v692 = vunpack.c.h.b16 %v429
    %v693 = vunpack.c.l.b16 %v430
    %v694 = vunpack.c.l.b16 %v431
    %v695 = vunpack.c.h.b16 %v431
    %v696 = vunpack.c.l.b16 %v432
    %v697 = vunpack.c.l.b16 %v433
    %v698 = vunpack.c.h.b16 %v433
    %v699 = vunpack.c.l.b16 %v434
    %v700 = vunpack.c.l.b16 %v435
    %v701 = vunpack.c.h.b16 %v435
    %v702 = vunpack.c.l.b16 %v436
    %v703 = vunpack.c.l.b16 %v437
    %v704 = vunpack.c.h.b16 %v437
    %v705 = vunpack.c.l.b16 %v438
    %v706 = vunpack.c.l.b16 %v439
    %v707 = vunpack.c.h.b16 %v439
    %v708 = vunpack.c.l.b16 %v440
    %v709 = vunpack.c.l.b16 %v441
    %v710 = vunpack.c.h.b16 %v441
    %v711 = vunpack.c.l.b16 %v442
    %v712 = vunpack.c.l.b16 %v443
    %v713 = vunpack.c.h.b16 %v443
    %v714 = vunpack.c.l.b16 %v444
    %v715 = vunpack.c.l.b16 %v445
    %v716 = vunpack.c.h.b16 %v445
    %v717 = vunpack.c.l.b16 %v446
    %v718 = vunpack.c.l.b16 %v447
    %v719 = vunpack.c.h.b16 %v447
    %v720 = vunpack.c.l.b16 %v448
    %v721 = vunpack.c.l.b16 %v449
    %v722 = vunpack.c.h.b16 %v449
    %v723 = vunpack.c.l.b16 %v450
    %v724 = vunpack.c.l.b16 %v451
    %v725 = vunpack.c.h.b16 %v451
    %v726 = vunpack.c.l.b16 %v452
    %v727 = vunpack.c.l.b16 %v453
    %v728 = vunpack.c.h.b16 %v453
    %v729 = vunpack.c.l.b16 %v454
    %v730 = vunpack.c.l.b16 %v455
    %v731 = vunpack.c.h.b16 %v455
    %v732 = vunpack.c.l.b16 %v456
    %v733 = vunpack.c.l.b16 %v457
    %v734 = vunpack.c.h.b16 %v457
    %v735 = vunpack.c.l.b16 %v458
    %v736 = vunpack.c.l.b16 %v459
    %v737 = vunpack.c.h.b16 %v459
    %v738 = vunpack.c.l.b16 %v460
    %v739 = vunpack.c.l.b16 %v461
    %v740 = vunpack.c.h.b16 %v461
    %v741 = vunpack.c.l.b16 %v462
    %v742 = vunpack.c.l.b16 %v463
    %v743 = vunpack.c.h.b16 %v463
    %v744 = vunpack.c.l.b16 %v464
    %v745 = vunpack.c.l.b16 %v465
    %v746 = vunpack.c.h.b16 %v465
    %v747 = vunpack.c.l.b16 %v466
    %v748 = vunpack.c.l.b16 %v467
    %v749 = vunpack.c.h.b16 %v467
    %v750 = vunpack.c.l.b16 %v468
    %v751 = vunpack.c.l.b16 %v469
    %v752 = vunpack.c.h.b16 %v469
    %v753 = vunpack.c.l.b16 %v470
    %v754 = vunpack.c.l.b16 %v471
    %v755 = vunpack.c.h.b16 %v471
    %v756 = vunpack.c.l.b16 %v472
    %v757 = vunpack.c.l.b16 %v473
    %v758 = vunpack.c.h.b16 %v473
    %v759 = vunpack.c.l.b16 %v474
    %v760 = vpack.c.b16 %v613, %v610
    %v761 = vpack.c.b16 %v614, %v611
    %v762 = vpack.c.b16 %v615, %v612
    %v763 = vpack.c.b16 %v619, %v616
    %v764 = vpack.c.b16 %v620, %v617
    %v765 = vpack.c.b16 %v621, %v618
    %v766 = vpack.c.b16 %v625, %v622
    %v767 = vpack.c.b16 %v626, %v623
    %v768 = vpack.c.b16 %v627, %v624
    %v769 = vpack.c.b16 %v631, %v628
    %v770 = vpack.c.b16 %v632, %v629
    %v771 = vpack.c.b16 %v633, %v630
    %v772 = vpack.c.b16 %v637, %v634
    %v773 = vpack.c.b16 %v638, %v635
    %v774 = vpack.c.b16 %v639, %v636
    %v775 = vpack.c.b16 %v643, %v640
    %v776 = vpack.c.b16 %v644, %v641
    %v777 = vpack.c.b16 %v645, %v642
    %v778 = vpack.c.b16 %v649, %v646
    %v779 = vpack.c.b16 %v650, %v647
    %v780 = vpack.c.b16 %v651, %v648
    %v781 = vpack.c.b16 %v655, %v652
    %v782 = vpack.c.b16 %v656, %v653
    %v783 = vpack.c.b16 %v657, %v654
    %v784 = vpack.c.b16 %v661, %v658
    %v785 = vpack.c.b16 %v662, %v659
    %v786 = vpack.c.b16 %v663, %v660
    %v787 = vpack.c.b16 %v667, %v664
    %v788 = vpack.c.b16 %v668, %v665
    %v789 = vpack.c.b16 %v669, %v666
    %v790 = vpack.c.b16 %v673, %v670
    %v791 = vpack.c.b16 %v674, %v671
    %v792 = vpack.c.b16 %v675, %v672
    %v793 = vpack.c.b16 %v679, %v676
    %v794 = vpack.c.b16 %v680, %v677
    %v795 = vpack.c.b16 %v681, %v678
    %v796 = vpack.c.b16 %v685, %v682
    %v797 = vpack.c.b16 %v686, %v683
    %v798 = vpack.c.b16 %v687, %v684
    %v799 = vpack.c.b16 %v691, %v688
    %v800 = vpack.c.b16 %v692, %v689
    %v801 = vpack.c.b16 %v693, %v690
    %v802 = vpack.c.b16 %v697, %v694
    %v803 = vpack.c.b16 %v698, %v695
    %v804 = vpack.c.b16 %v699, %v696
    %v805 = vpack.c.b16 %v703, %v700
    %v806 = vpack.c.b16 %v704, %v701
    %v807 = vpack.c.b16 %v705, %v702
    %v808 = vpack.c.b16 %v709, %v706
    %v809 = vpack.c.b16 %v710, %v707
    %v810 = vpack.c.b16 %v711, %v708
    %v811 = vpack.c.b16 %v715, %v712
    %v812 = vpack.c.b16 %v716, %v713
    %v813 = vpack.c.b16 %v717, %v714
    %v814 = vpack.c.b16 %v721, %v718
    %v815 = vpack.c.b16 %v722, %v719
    %v816 = vpack.c.b16 %v723, %v720
    %v817 = vpack.c.b16 %v727, %v724
    %v818 = vpack.c.b16 %v728, %v725
    %v819 = vpack.c.b16 %v729, %v726
    %v820 = vpack.c.b16 %v733, %v730
    %v821 = vpack.c.b16 %v734, %v731
    %v822 = vpack.c.b16 %v735, %v732
    %v823 = vpack.c.b16 %v739, %v736
    %v824 = vpack.c.b16 %v740, %v737
    %v825 = vpack.c.b16 %v741, %v738
    %v826 = vpack.c.b16 %v745, %v742
    %v827 = vpack.c.b16 %v746, %v743
    %v828 = vpack.c.b16 %v747, %v744
    %v829 = vpack.c.b16 %v751, %v748
    %v830 = vpack.c.b16 %v752, %v749
    %v831 = vpack.c.b16 %v753, %v750
    %v832 = vpack.c.b16 %v757, %v754
    %v833 = vpack.c.b16 %v758, %v755
    %v834 = vpack.c.b16 %v759, %v756
    %v911 = vsel %vm263, %v478, 0
    %913 = vmatprep.subr.bf16.mxu0 %v761
    %914 = vmatpush1.bf16.msra.mxu0 %v760
    %915 = vmatprep.subr.bf16.mxu0 %v764
    %916 = vmatpush1.bf16.msra.mxu0 %v763
    %917 = vmatprep.subr.bf16.mxu0 %v767
    %918 = vmatpush1.bf16.msra.mxu0 %v766
    %919 = vmatprep.subr.bf16.mxu0 %v770
    %920 = vmatpush1.bf16.msra.mxu0 %v769
    %921 = vmatprep.subr.bf16.mxu0 %v773
    %922 = vmatpush1.bf16.msra.mxu0 %v772
    %923 = vmatprep.subr.bf16.mxu0 %v776
    %924 = vmatpush1.bf16.msra.mxu0 %v775
    %925 = vmatprep.subr.bf16.mxu0 %v779
    %926 = vmatpush1.bf16.msra.mxu0 %v778
    %927 = vmatprep.subr.bf16.mxu0 %v782
    %928 = vmatpush1.bf16.msra.mxu0 %v781
    %929 = vmatprep.subr.bf16.mxu0 %v785
    %930 = vmatpush1.bf16.msra.mxu0 %v784
    %931 = vmatprep.subr.bf16.mxu0 %v788
    %932 = vmatpush1.bf16.msra.mxu0 %v787
    %933 = vmatprep.subr.bf16.mxu0 %v791
    %934 = vmatpush1.bf16.msra.mxu0 %v790
    %935 = vmatprep.subr.bf16.mxu0 %v794
    %936 = vmatpush1.bf16.msra.mxu0 %v793
    %937 = vmatprep.subr.bf16.mxu0 %v797
    %938 = vmatpush1.bf16.msra.mxu0 %v796
    %939 = vmatprep.subr.bf16.mxu0 %v800
    %940 = vmatpush1.bf16.msra.mxu0 %v799
    %941 = vmatprep.subr.bf16.mxu0 %v803
    %942 = vmatpush1.bf16.msra.mxu0 %v802
    %943 = vmatprep.subr.bf16.mxu0 %v806
    %944 = vmatpush1.bf16.msra.mxu0 %v805
    %945 = vmatprep.mubr.bf16.mxu0 %v476
    %946 = vmatmul.mubr.bf16.gmra.mrb[0].mxu0 %v475
    %v947 = vpop.f32.mrb[0].mxu0
    %v948 = vadd.f32 %v501, %v947
    %v949 = vpop.f32.mrb[0].mxu0
    %v950 = vadd.f32 %v505, %v949
    %v951 = vpop.f32.mrb[0].mxu0
    %v952 = vpop.f32.mrb[0].mxu0
    %953 = vdwg.mxu0
    %954 = vmatprep.subr.bf16.mxu0 %v809
    %955 = vmatpush1.bf16.msra.mxu0 %v808
    %956 = vmatprep.subr.bf16.mxu0 %v812
    %957 = vmatpush1.bf16.msra.mxu0 %v811
    %958 = vmatprep.subr.bf16.mxu0 %v815
    %959 = vmatpush1.bf16.msra.mxu0 %v814
    %960 = vmatprep.subr.bf16.mxu0 %v818
    %961 = vmatpush1.bf16.msra.mxu0 %v817
    %962 = vmatprep.subr.bf16.mxu0 %v821
    %963 = vmatpush1.bf16.msra.mxu0 %v820
    %964 = vmatprep.subr.bf16.mxu0 %v824
    %965 = vmatpush1.bf16.msra.mxu0 %v823
    %966 = vmatprep.subr.bf16.mxu0 %v827
    %967 = vmatpush1.bf16.msra.mxu0 %v826
    %968 = vmatprep.subr.bf16.mxu0 %v830
    %969 = vmatpush1.bf16.msra.mxu0 %v829
    %970 = vmatprep.subr.bf16.mxu0 %v833
    %971 = vmatpush1.bf16.msra.mxu0 %v832
    %972 = vmatprep.subr.bf16.mxu0 0
    %973 = vmatpush1.bf16.msra.mxu0 0
    %974 = vmatprep.subr.bf16.mxu0 0
    %975 = vmatpush1.bf16.msra.mxu0 0
    %976 = vmatprep.subr.bf16.mxu0 0
    %977 = vmatpush1.bf16.msra.mxu0 0
    %978 = vmatprep.subr.bf16.mxu0 0
    %979 = vmatpush1.bf16.msra.mxu0 0
    %980 = vmatprep.subr.bf16.mxu0 0
    %981 = vmatpush1.bf16.msra.mxu0 0
    %982 = vmatprep.subr.bf16.mxu0 0
    %983 = vmatpush1.bf16.msra.mxu0 0
    %984 = vmatprep.subr.bf16.mxu0 0
    %985 = vmatpush1.bf16.msra.mxu0 0
    %986 = vmatprep.mubr.bf16.mxu0 %v911
    %987 = vmatmul.mubr.bf16.gmra.mrb[0].mxu0 %v477
    %v988 = vpop.f32.mrb[0].mxu0
    %v989 = vadd.f32 %v948, %v988
    %v990 = vpop.f32.mrb[0].mxu0
    %v991 = vadd.f32 %v950, %v990
    %v992 = vpop.f32.mrb[0].mxu0
    %v993 = vpop.f32.mrb[0].mxu0
    %994 = vdwg.mxu0
    %995 = vmatprep.subr.bf16.mxu0 0
    %996 = vmatpush1.bf16.msra.mxu0 %v762
    %997 = vmatprep.subr.bf16.mxu0 0
    %998 = vmatpush1.bf16.msra.mxu0 %v765
    %999 = vmatprep.subr.bf16.mxu0 0
    %1000 = vmatpush1.bf16.msra.mxu0 %v768
    %1001 = vmatprep.subr.bf16.mxu0 0
    %1002 = vmatpush1.bf16.msra.mxu0 %v771
    %1003 = vmatprep.subr.bf16.mxu0 0
    %1004 = vmatpush1.bf16.msra.mxu0 %v774
    %1005 = vmatprep.subr.bf16.mxu0 0
    %1006 = vmatpush1.bf16.msra.mxu0 %v777
    %1007 = vmatprep.subr.bf16.mxu0 0
    %1008 = vmatpush1.bf16.msra.mxu0 %v780
    %1009 = vmatprep.subr.bf16.mxu0 0
    %1010 = vmatpush1.bf16.msra.mxu0 %v783
    %1011 = vmatprep.subr.bf16.mxu0 0
    %1012 = vmatpush1.bf16.msra.mxu0 %v786
    %1013 = vmatprep.subr.bf16.mxu0 0
    %1014 = vmatpush1.bf16.msra.mxu0 %v789
    %1015 = vmatprep.subr.bf16.mxu0 0
    %1016 = vmatpush1.bf16.msra.mxu0 %v792
    %1017 = vmatprep.subr.bf16.mxu0 0
    %1018 = vmatpush1.bf16.msra.mxu0 %v795
    %1019 = vmatprep.subr.bf16.mxu0 0
    %1020 = vmatpush1.bf16.msra.mxu0 %v798
    %1021 = vmatprep.subr.bf16.mxu0 0
    %1022 = vmatpush1.bf16.msra.mxu0 %v801
    %1023 = vmatprep.subr.bf16.mxu0 0
    %1024 = vmatpush1.bf16.msra.mxu0 %v804
    %1025 = vmatprep.subr.bf16.mxu0 0
    %1026 = vmatpush1.bf16.msra.mxu0 %v807
    %1027 = vmatprep.mubr.bf16.mxu0 %v476
    %1028 = vmatmul.mubr.bf16.gmra.mrb[0].mxu0 %v475
    %v1029 = vpop.f32.mrb[0].mxu0
    %v1030 = vadd.f32 %v509, %v1029
    %v1031 = vpop.f32.mrb[0].mxu0
    %v1032 = vpop.f32.mrb[0].mxu0
    %v1033 = vpop.f32.mrb[0].mxu0
    %1034 = vdwg.mxu0
    %1035 = vmatprep.subr.bf16.mxu0 0
    %1036 = vmatpush1.bf16.msra.mxu0 %v810
    %1037 = vmatprep.subr.bf16.mxu0 0
    %1038 = vmatpush1.bf16.msra.mxu0 %v813
    %1039 = vmatprep.subr.bf16.mxu0 0
    %1040 = vmatpush1.bf16.msra.mxu0 %v816
    %1041 = vmatprep.subr.bf16.mxu0 0
    %1042 = vmatpush1.bf16.msra.mxu0 %v819
    %1043 = vmatprep.subr.bf16.mxu0 0
    %1044 = vmatpush1.bf16.msra.mxu0 %v822
    %1045 = vmatprep.subr.bf16.mxu0 0
    %1046 = vmatpush1.bf16.msra.mxu0 %v825
    %1047 = vmatprep.subr.bf16.mxu0 0
    %1048 = vmatpush1.bf16.msra.mxu0 %v828
    %1049 = vmatprep.subr.bf16.mxu0 0
    %1050 = vmatpush1.bf16.msra.mxu0 %v831
    %1051 = vmatprep.subr.bf16.mxu0 0
    %1052 = vmatpush1.bf16.msra.mxu0 %v834
    %1053 = vmatprep.subr.bf16.mxu0 0
    %1054 = vmatpush1.bf16.msra.mxu0 0
    %1055 = vmatprep.subr.bf16.mxu0 0
    %1056 = vmatpush1.bf16.msra.mxu0 0
    %1057 = vmatprep.subr.bf16.mxu0 0
    %1058 = vmatpush1.bf16.msra.mxu0 0
    %1059 = vmatprep.subr.bf16.mxu0 0
    %1060 = vmatpush1.bf16.msra.mxu0 0
    %1061 = vmatprep.subr.bf16.mxu0 0
    %1062 = vmatpush1.bf16.msra.mxu0 0
    %1063 = vmatprep.subr.bf16.mxu0 0
    %1064 = vmatpush1.bf16.msra.mxu0 0
    %1065 = vmatprep.subr.bf16.mxu0 0
    %1066 = vmatpush1.bf16.msra.mxu0 0
    %1067 = vmatprep.mubr.bf16.mxu0 %v911
    %1068 = vmatmul.mubr.bf16.gmra.mrb[0].mxu0 %v477
    %v1069 = vpop.f32.mrb[0].mxu0
    %v1070 = vadd.f32 %v1030, %v1069
    %v1071 = vpop.f32.mrb[0].mxu0
    %v1072 = vpop.f32.mrb[0].mxu0
    %v1073 = vpop.f32.mrb[0].mxu0
    %1074 = vdwg.mxu0
    %v1075 = vadd.f32 %v989, %v991
    %vm1076 = vcmask 359424
    %v1077 = vsel %vm1076, %v1070, 0.0
    %v1078 = vadd.f32 %v1075, %v1077
    %1079 = vadd.xlane.f32.xlu0 %v1078
    %v1080 = vpop.xlane.xlu0 %1079
    %v1081 = vrcp.pop 300.0
    %v1082 = vmul.f32 %v1080, %v1081
    %v1083 = vsub.f32 %v989, %v1082
    %v1084 = vsub.f32 %v991, %v1082
    %v1085 = vsub.f32 %v1070, %v1082
    %v1086 = vmul.f32 %v1083, %v1083
    %v1087 = vmul.f32 %v1084, %v1084
    %v1088 = vmul.f32 %v1085, %v1085
    %v1089 = vadd.f32 %v1086, %v1087
    %v1090 = vsel %vm1076, %v1088, 0.0
    %v1091 = vadd.f32 %v1089, %v1090
    %1092 = vadd.xlane.f32.xlu0 %v1091
    %v1093 = vpop.xlane.xlu0 %1092
    %v1094 = vmul.f32 %v1093, %v1081
    %v1095 = vadd.f32 %v1094, 1e-05
    %v1096 = vrsqrt.pop %v1095
    %v1097 = vmul.f32 %v1083, %v1096
    %v1098 = vmul.f32 %v1084, %v1096
    %v1099 = vmul.f32 %v1085, %v1096
    %v1100 = vlaneseq
    %v1101 = vshrl.u32 %v1100, 7
    %v1102 = vsub.s32 1, %v1101
    %v1103 = vrot.slane %v479, %v1102
    %v1104 = vlaneseq
    %v1105 = vshrl.u32 %v1104, 7
    %v1106 = vsub.s32 5, %v1105
    %v1107 = vrot.slane %v479, %v1106
    %v1108 = vlaneseq
    %v1109 = vshrl.u32 %v1108, 7
    %v1110 = vsub.s32 1, %v1109
    %v1111 = vrot.slane %v480, %v1110
    %v1115 = vlaneseq
    %v1116 = vshrl.u32 %v1115, 7
    %v1117 = vsub.s32 1, %v1116
    %v1118 = vrot.slane %v1103, %v1117
    %v1119 = vlaneseq
    %v1120 = vshrl.u32 %v1119, 7
    %v1121 = vsub.s32 1, %v1120
    %v1122 = vrot.slane %v1107, %v1121
    %v1123 = vlaneseq
    %v1124 = vshrl.u32 %v1123, 7
    %v1125 = vsub.s32 1, %v1124
    %v1126 = vrot.slane %v1111, %v1125
    %v1127 = vmul.f32 %v1097, %v1118
    %v1128 = vmul.f32 %v1098, %v1122
    %v1129 = vmul.f32 %v1099, %v1126
    %v1130 = vlaneseq
    %v1131 = vshrl.u32 %v1130, 7
    %v1132 = vsub.s32 2, %v1131
    %v1133 = vrot.slane %v479, %v1132
    %v1134 = vlaneseq
    %v1135 = vshrl.u32 %v1134, 7
    %v1136 = vsub.s32 6, %v1135
    %v1137 = vrot.slane %v479, %v1136
    %v1138 = vlaneseq
    %v1139 = vshrl.u32 %v1138, 7
    %v1140 = vsub.s32 2, %v1139
    %v1141 = vrot.slane %v480, %v1140
    %v1145 = vlaneseq
    %v1146 = vshrl.u32 %v1145, 7
    %v1147 = vsub.s32 2, %v1146
    %v1148 = vrot.slane %v1133, %v1147
    %v1149 = vlaneseq
    %v1150 = vshrl.u32 %v1149, 7
    %v1151 = vsub.s32 2, %v1150
    %v1152 = vrot.slane %v1137, %v1151
    %v1153 = vlaneseq
    %v1154 = vshrl.u32 %v1153, 7
    %v1155 = vsub.s32 2, %v1154
    %v1156 = vrot.slane %v1141, %v1155
    %v1157 = vadd.f32 %v1127, %v1148
    %v1158 = vadd.f32 %v1128, %v1152
    %v1159 = vadd.f32 %v1129, %v1156
    %v1160 = vmax.f32 %v1157, 0.0
    %v1161 = vmax.f32 %v1158, 0.0
    %v1162 = vmax.f32 %v1159, 0.0
    %v1163 = vld [vmem:[%s5] sm:$0xff]
    %v1164 = vld [vmem:[%s5 + $0x8] sm:$0xff]
    %v1165 = vld [vmem:[%s5 + $0x10] sm:$0xff]
    %v1166 = vld [vmem:[%s5 + $0x18] sm:$0xff]
    %v1167 = vld [vmem:[%s5 + $0x20] sm:$0xff]
    %v1168 = vld [vmem:[%s5 + $0x28] sm:$0xff]
    %v1169 = vld [vmem:[%s5 + $0x30] sm:$0xff]
    %v1170 = vld [vmem:[%s5 + $0x38] sm:$0xff]
    %v1171 = vld [vmem:[%s5 + $0x40] sm:$0xff]
    %v1172 = vld [vmem:[%s5 + $0x48] sm:$0xff]
    %v1173 = vld [vmem:[%s5 + $0x50] sm:$0xff]
    %v1174 = vld [vmem:[%s5 + $0x58] sm:$0xff]
    %v1175 = vld [vmem:[%s5 + $0x60] sm:$0xff]
    %v1176 = vld [vmem:[%s5 + $0x68] sm:$0xff]
    %v1177 = vld [vmem:[%s5 + $0x70] sm:$0xff]
    %v1178 = vld [vmem:[%s5 + $0x78] sm:$0xff]
    %v1179 = vld [vmem:[%s5 + $0x80] sm:$0xff]
    %v1180 = vld [vmem:[%s5 + $0x88] sm:$0xff]
    %v1181 = vld [vmem:[%s5 + $0x90] sm:$0xff]
    %v1182 = vld [vmem:[%s5 + $0x98] sm:$0xff]
    %v1183 = vld [vmem:[%s5 + $0xa0] sm:$0xff]
    %v1184 = vld [vmem:[%s5 + $0xa8] sm:$0xff]
    %v1185 = vld [vmem:[%s5 + $0xb0] sm:$0xff]
    %v1186 = vld [vmem:[%s5 + $0xb8] sm:$0xff]
    %v1187 = vld [vmem:[%s5 + $0xc0] sm:$0xff]
    %v1188 = vld [vmem:[%s5 + $0xc8] sm:$0xff]
    %v1189 = vld [vmem:[%s5 + $0xd0] sm:$0xff]
    %v1190 = vld [vmem:[%s5 + $0xd8] sm:$0xff]
    %v1191 = vld [vmem:[%s5 + $0xe0] sm:$0xff]
    %v1192 = vld [vmem:[%s5 + $0xe8] sm:$0xff]
    %v1193 = vld [vmem:[%s5 + $0xf0] sm:$0xff]
    %v1194 = vld [vmem:[%s5 + $0xf8] sm:$0xff]
    %v1195 = vld [vmem:[%s5 + $0x100] sm:$0xff]
    %v1196 = vld [vmem:[%s5 + $0x108] sm:$0xff]
    %v1197 = vld [vmem:[%s5 + $0x110] sm:$0xff]
    %v1198 = vld [vmem:[%s5 + $0x118] sm:$0xff]
    %v1199 = vld [vmem:[%s5 + $0x120] sm:$0xff]
    %v1200 = vld [vmem:[%s5 + $0x128] sm:$0x33]
    %v1201 = vpack.c.bf16 %v1160, %v1160
    %v1202 = vpack.c.bf16 %v1161, %v1161
    %v1203 = vpack.c.bf16 %v1162, %v1162
    %v1204 = vld [vmem:[#allocation6] sm:$0x77]
    %v1206 = vlaneseq
    %v1207 = vshrl.u32 %v1206, 7
    %v1208 = vsub.s32 0, %v1207
    %v1209 = vrot.slane %v1204, %v1208
    %v1210 = vlaneseq
    %v1211 = vshrl.u32 %v1210, 7
    %v1212 = vsub.s32 4, %v1211
    %v1213 = vrot.slane %v1204, %v1212
    %v1216 = vlaneseq
    %v1217 = vshrl.u32 %v1216, 7
    %v1218 = vsub.s32 0, %v1217
    %v1219 = vrot.slane %v1209, %v1218
    %v1220 = vlaneseq
    %v1221 = vshrl.u32 %v1220, 7
    %v1222 = vsub.s32 0, %v1221
    %v1223 = vrot.slane %v1213, %v1222
    %v1262 = vunpack.c.l.b16 %v1163
    %v1263 = vunpack.c.h.b16 %v1163
    %v1264 = vunpack.c.l.b16 %v1164
    %v1265 = vunpack.c.h.b16 %v1164
    %v1266 = vunpack.c.l.b16 %v1165
    %v1267 = vunpack.c.h.b16 %v1165
    %v1268 = vunpack.c.l.b16 %v1166
    %v1269 = vunpack.c.h.b16 %v1166
    %v1270 = vunpack.c.l.b16 %v1167
    %v1271 = vunpack.c.h.b16 %v1167
    %v1272 = vunpack.c.l.b16 %v1168
    %v1273 = vunpack.c.h.b16 %v1168
    %v1274 = vunpack.c.l.b16 %v1169
    %v1275 = vunpack.c.h.b16 %v1169
    %v1276 = vunpack.c.l.b16 %v1170
    %v1277 = vunpack.c.h.b16 %v1170
    %v1278 = vunpack.c.l.b16 %v1171
    %v1279 = vunpack.c.h.b16 %v1171
    %v1280 = vunpack.c.l.b16 %v1172
    %v1281 = vunpack.c.h.b16 %v1172
    %v1282 = vunpack.c.l.b16 %v1173
    %v1283 = vunpack.c.h.b16 %v1173
    %v1284 = vunpack.c.l.b16 %v1174
    %v1285 = vunpack.c.h.b16 %v1174
    %v1286 = vunpack.c.l.b16 %v1175
    %v1287 = vunpack.c.h.b16 %v1175
    %v1288 = vunpack.c.l.b16 %v1176
    %v1289 = vunpack.c.h.b16 %v1176
    %v1290 = vunpack.c.l.b16 %v1177
    %v1291 = vunpack.c.h.b16 %v1177
    %v1292 = vunpack.c.l.b16 %v1178
    %v1293 = vunpack.c.h.b16 %v1178
    %v1294 = vunpack.c.l.b16 %v1179
    %v1295 = vunpack.c.h.b16 %v1179
    %v1296 = vunpack.c.l.b16 %v1180
    %v1297 = vunpack.c.h.b16 %v1180
    %v1298 = vunpack.c.l.b16 %v1181
    %v1299 = vunpack.c.h.b16 %v1181
    %v1300 = vunpack.c.l.b16 %v1182
    %v1301 = vunpack.c.h.b16 %v1182
    %v1302 = vunpack.c.l.b16 %v1183
    %v1303 = vunpack.c.h.b16 %v1183
    %v1304 = vunpack.c.l.b16 %v1184
    %v1305 = vunpack.c.h.b16 %v1184
    %v1306 = vunpack.c.l.b16 %v1185
    %v1307 = vunpack.c.h.b16 %v1185
    %v1308 = vunpack.c.l.b16 %v1186
    %v1309 = vunpack.c.h.b16 %v1186
    %v1310 = vunpack.c.l.b16 %v1187
    %v1311 = vunpack.c.h.b16 %v1187
    %v1312 = vunpack.c.l.b16 %v1188
    %v1313 = vunpack.c.h.b16 %v1188
    %v1314 = vunpack.c.l.b16 %v1189
    %v1315 = vunpack.c.h.b16 %v1189
    %v1316 = vunpack.c.l.b16 %v1190
    %v1317 = vunpack.c.h.b16 %v1190
    %v1318 = vunpack.c.l.b16 %v1191
    %v1319 = vunpack.c.h.b16 %v1191
    %v1320 = vunpack.c.l.b16 %v1192
    %v1321 = vunpack.c.h.b16 %v1192
    %v1322 = vunpack.c.l.b16 %v1193
    %v1323 = vunpack.c.h.b16 %v1193
    %v1324 = vunpack.c.l.b16 %v1194
    %v1325 = vunpack.c.h.b16 %v1194
    %v1326 = vunpack.c.l.b16 %v1195
    %v1327 = vunpack.c.h.b16 %v1195
    %v1328 = vunpack.c.l.b16 %v1196
    %v1329 = vunpack.c.h.b16 %v1196
    %v1330 = vunpack.c.l.b16 %v1197
    %v1331 = vunpack.c.h.b16 %v1197
    %v1332 = vunpack.c.l.b16 %v1198
    %v1333 = vunpack.c.h.b16 %v1198
    %v1334 = vunpack.c.l.b16 %v1199
    %v1335 = vunpack.c.h.b16 %v1199
    %v1336 = vunpack.c.l.b16 %v1200
    %v1337 = vunpack.c.h.b16 %v1200
    %v1338 = vpack.c.b16 %v1264, %v1262
    %v1339 = vpack.c.b16 %v1265, %v1263
    %v1340 = vpack.c.b16 %v1268, %v1266
    %v1341 = vpack.c.b16 %v1269, %v1267
    %v1342 = vpack.c.b16 %v1272, %v1270
    %v1343 = vpack.c.b16 %v1273, %v1271
    %v1344 = vpack.c.b16 %v1276, %v1274
    %v1345 = vpack.c.b16 %v1277, %v1275
    %v1346 = vpack.c.b16 %v1280, %v1278
    %v1347 = vpack.c.b16 %v1281, %v1279
    %v1348 = vpack.c.b16 %v1284, %v1282
    %v1349 = vpack.c.b16 %v1285, %v1283
    %v1350 = vpack.c.b16 %v1288, %v1286
    %v1351 = vpack.c.b16 %v1289, %v1287
    %v1352 = vpack.c.b16 %v1292, %v1290
    %v1353 = vpack.c.b16 %v1293, %v1291
    %v1354 = vpack.c.b16 %v1296, %v1294
    %v1355 = vpack.c.b16 %v1297, %v1295
    %v1356 = vpack.c.b16 %v1300, %v1298
    %v1357 = vpack.c.b16 %v1301, %v1299
    %v1358 = vpack.c.b16 %v1304, %v1302
    %v1359 = vpack.c.b16 %v1305, %v1303
    %v1360 = vpack.c.b16 %v1308, %v1306
    %v1361 = vpack.c.b16 %v1309, %v1307
    %v1362 = vpack.c.b16 %v1312, %v1310
    %v1363 = vpack.c.b16 %v1313, %v1311
    %v1364 = vpack.c.b16 %v1316, %v1314
    %v1365 = vpack.c.b16 %v1317, %v1315
    %v1366 = vpack.c.b16 %v1320, %v1318
    %v1367 = vpack.c.b16 %v1321, %v1319
    %v1368 = vpack.c.b16 %v1324, %v1322
    %v1369 = vpack.c.b16 %v1325, %v1323
    %v1370 = vpack.c.b16 %v1328, %v1326
    %v1371 = vpack.c.b16 %v1329, %v1327
    %v1372 = vpack.c.b16 %v1332, %v1330
    %v1373 = vpack.c.b16 %v1333, %v1331
    %v1374 = vpack.c.b16 %v1336, %v1334
    %v1375 = vpack.c.b16 %v1337, %v1335
    %v1413 = vsel %vm1076, %v1203, 0
    %vm1415 = vcmask 1045504
    %v1417 = vsel %vm1415, %v1374, 0
    %v1420 = vsel %vm1415, %v1375, 0
    %1422 = vmatprep.subr.bf16.mxu0 %v1339
    %1423 = vmatpush1.bf16.msra.mxu0 %v1338
    %1424 = vmatprep.subr.bf16.mxu0 %v1341
    %1425 = vmatpush1.bf16.msra.mxu0 %v1340
    %1426 = vmatprep.subr.bf16.mxu0 %v1343
    %1427 = vmatpush1.bf16.msra.mxu0 %v1342
    %1428 = vmatprep.subr.bf16.mxu0 %v1345
    %1429 = vmatpush1.bf16.msra.mxu0 %v1344
    %1430 = vmatprep.subr.bf16.mxu0 %v1347
    %1431 = vmatpush1.bf16.msra.mxu0 %v1346
    %1432 = vmatprep.subr.bf16.mxu0 %v1349
    %1433 = vmatpush1.bf16.msra.mxu0 %v1348
    %1434 = vmatprep.subr.bf16.mxu0 %v1351
    %1435 = vmatpush1.bf16.msra.mxu0 %v1350
    %1436 = vmatprep.subr.bf16.mxu0 %v1353
    %1437 = vmatpush1.bf16.msra.mxu0 %v1352
    %1438 = vmatprep.subr.bf16.mxu0 %v1355
    %1439 = vmatpush1.bf16.msra.mxu0 %v1354
    %1440 = vmatprep.subr.bf16.mxu0 %v1357
    %1441 = vmatpush1.bf16.msra.mxu0 %v1356
    %1442 = vmatprep.subr.bf16.mxu0 %v1359
    %1443 = vmatpush1.bf16.msra.mxu0 %v1358
    %1444 = vmatprep.subr.bf16.mxu0 %v1361
    %1445 = vmatpush1.bf16.msra.mxu0 %v1360
    %1446 = vmatprep.subr.bf16.mxu0 %v1363
    %1447 = vmatpush1.bf16.msra.mxu0 %v1362
    %1448 = vmatprep.subr.bf16.mxu0 %v1365
    %1449 = vmatpush1.bf16.msra.mxu0 %v1364
    %1450 = vmatprep.subr.bf16.mxu0 %v1367
    %1451 = vmatpush1.bf16.msra.mxu0 %v1366
    %1452 = vmatprep.subr.bf16.mxu0 %v1369
    %1453 = vmatpush1.bf16.msra.mxu0 %v1368
    %1454 = vmatprep.mubr.bf16.mxu0 %v1202
    %1455 = vmatmul.mubr.bf16.gmra.mrb[0].mxu0 %v1201
    %v1456 = vpop.f32.mrb[0].mxu0
    %v1457 = vadd.f32 %v1219, %v1456
    %v1458 = vpop.f32.mrb[0].mxu0
    %v1459 = vadd.f32 %v1223, %v1458
    %v1460 = vpop.f32.mrb[0].mxu0
    %v1461 = vpop.f32.mrb[0].mxu0
    %1462 = vdwg.mxu0
    %1463 = vmatprep.subr.bf16.mxu0 %v1371
    %1464 = vmatpush1.bf16.msra.mxu0 %v1370
    %1465 = vmatprep.subr.bf16.mxu0 %v1373
    %1466 = vmatpush1.bf16.msra.mxu0 %v1372
    %1467 = vmatprep.subr.bf16.mxu0 %v1420
    %1468 = vmatpush1.bf16.msra.mxu0 %v1417
    %1469 = vmatprep.subr.bf16.mxu0 0
    %1470 = vmatpush1.bf16.msra.mxu0 0
    %1471 = vmatprep.subr.bf16.mxu0 0
    %1472 = vmatpush1.bf16.msra.mxu0 0
    %1473 = vmatprep.subr.bf16.mxu0 0
    %1474 = vmatpush1.bf16.msra.mxu0 0
    %1475 = vmatprep.subr.bf16.mxu0 0
    %1476 = vmatpush1.bf16.msra.mxu0 0
    %1477 = vmatprep.subr.bf16.mxu0 0
    %1478 = vmatpush1.bf16.msra.mxu0 0
    %1479 = vmatprep.subr.bf16.mxu0 0
    %1480 = vmatpush1.bf16.msra.mxu0 0
    %1481 = vmatprep.subr.bf16.mxu0 0
    %1482 = vmatpush1.bf16.msra.mxu0 0
    %1483 = vmatprep.subr.bf16.mxu0 0
    %1484 = vmatpush1.bf16.msra.mxu0 0
    %1485 = vmatprep.subr.bf16.mxu0 0
    %1486 = vmatpush1.bf16.msra.mxu0 0
    %1487 = vmatprep.subr.bf16.mxu0 0
    %1488 = vmatpush1.bf16.msra.mxu0 0
    %1489 = vmatprep.subr.bf16.mxu0 0
    %1490 = vmatpush1.bf16.msra.mxu0 0
    %1491 = vmatprep.subr.bf16.mxu0 0
    %1492 = vmatpush1.bf16.msra.mxu0 0
    %1493 = vmatprep.subr.bf16.mxu0 0
    %1494 = vmatpush1.bf16.msra.mxu0 0
    %1495 = vmatprep.mubr.bf16.mxu0 0
    %1496 = vmatmul.mubr.bf16.gmra.mrb[0].mxu0 %v1413
    %v1497 = vpop.f32.mrb[0].mxu0
    %v1498 = vadd.f32 %v1457, %v1497
    %v1499 = vpop.f32.mrb[0].mxu0
    %v1500 = vadd.f32 %v1459, %v1499
    %v1501 = vpop.f32.mrb[0].mxu0
    %v1502 = vpop.f32.mrb[0].mxu0
    %1503 = vdwg.mxu0
    %vm1504 = vcmask 588800
    %v1505 = vsel %vm1504, %v1500, 0.0
    %v1506 = vadd.f32 %v1498, %v1505
    %1507 = vadd.xlane.f32.xlu0 %v1506
    %v1508 = vpop.xlane.xlu0 %1507
    %v1509 = vrcp.pop 200.0
    %v1510 = vmul.f32 %v1508, %v1509
    %v1511 = vsub.f32 %v1498, %v1510
    %v1512 = vsub.f32 %v1500, %v1510
    %v1513 = vmul.f32 %v1511, %v1511
    %v1514 = vmul.f32 %v1512, %v1512
    %v1515 = vsel %vm1504, %v1514, 0.0
    %v1516 = vadd.f32 %v1513, %v1515
    %1517 = vadd.xlane.f32.xlu0 %v1516
    %v1518 = vpop.xlane.xlu0 %1517
    %v1519 = vmul.f32 %v1518, %v1509
    %v1520 = vadd.f32 %v1519, 1e-05
    %v1521 = vrsqrt.pop %v1520
    %v1522 = vmul.f32 %v1511, %v1521
    %v1523 = vmul.f32 %v1512, %v1521
    %v1524 = vlaneseq
    %v1525 = vshrl.u32 %v1524, 7
    %v1526 = vsub.s32 1, %v1525
    %v1527 = vrot.slane %v1204, %v1526
    %v1528 = vlaneseq
    %v1529 = vshrl.u32 %v1528, 7
    %v1530 = vsub.s32 5, %v1529
    %v1531 = vrot.slane %v1204, %v1530
    %v1534 = vlaneseq
    %v1535 = vshrl.u32 %v1534, 7
    %v1536 = vsub.s32 1, %v1535
    %v1537 = vrot.slane %v1527, %v1536
    %v1538 = vlaneseq
    %v1539 = vshrl.u32 %v1538, 7
    %v1540 = vsub.s32 1, %v1539
    %v1541 = vrot.slane %v1531, %v1540
    %v1542 = vmul.f32 %v1522, %v1537
    %v1543 = vmul.f32 %v1523, %v1541
    %v1544 = vlaneseq
    %v1545 = vshrl.u32 %v1544, 7
    %v1546 = vsub.s32 2, %v1545
    %v1547 = vrot.slane %v1204, %v1546
    %v1548 = vlaneseq
    %v1549 = vshrl.u32 %v1548, 7
    %v1550 = vsub.s32 6, %v1549
    %v1551 = vrot.slane %v1204, %v1550
    %v1554 = vlaneseq
    %v1555 = vshrl.u32 %v1554, 7
    %v1556 = vsub.s32 2, %v1555
    %v1557 = vrot.slane %v1547, %v1556
    %v1558 = vlaneseq
    %v1559 = vshrl.u32 %v1558, 7
    %v1560 = vsub.s32 2, %v1559
    %v1561 = vrot.slane %v1551, %v1560
    %v1562 = vadd.f32 %v1542, %v1557
    %v1563 = vadd.f32 %v1543, %v1561
    %v1564 = vmax.f32 %v1562, 0.0
    %v1565 = vmax.f32 %v1563, 0.0
    %v1566 = vld [vmem:[#allocation7] sm:$0xf]
    %v1567 = vld [vmem:[#allocation7 + $0x4] sm:$0xf]
    %v1568 = vld [vmem:[#allocation7 + $0x8] sm:$0xf]
    %v1569 = vld [vmem:[#allocation7 + $0xc] sm:$0xf]
    %v1570 = vld [vmem:[#allocation7 + $0x10] sm:$0xf]
    %v1571 = vld [vmem:[#allocation7 + $0x14] sm:$0xf]
    %v1572 = vld [vmem:[#allocation7 + $0x18] sm:$0xf]
    %v1573 = vld [vmem:[#allocation7 + $0x1c] sm:$0xf]
    %v1574 = vld [vmem:[#allocation7 + $0x20] sm:$0xf]
    %v1575 = vld [vmem:[#allocation7 + $0x24] sm:$0xf]
    %v1576 = vld [vmem:[#allocation7 + $0x28] sm:$0xf]
    %v1577 = vld [vmem:[#allocation7 + $0x2c] sm:$0xf]
    %v1578 = vld [vmem:[#allocation7 + $0x30] sm:$0xf]
    %v1579 = vld [vmem:[#allocation7 + $0x34] sm:$0xf]
    %v1580 = vld [vmem:[#allocation7 + $0x38] sm:$0xf]
    %v1581 = vld [vmem:[#allocation7 + $0x3c] sm:$0xf]
    %v1582 = vld [vmem:[#allocation7 + $0x40] sm:$0xf]
    %v1583 = vld [vmem:[#allocation7 + $0x44] sm:$0xf]
    %v1584 = vld [vmem:[#allocation7 + $0x48] sm:$0xf]
    %v1585 = vld [vmem:[#allocation7 + $0x4c] sm:$0xf]
    %v1586 = vld [vmem:[#allocation7 + $0x50] sm:$0xf]
    %v1587 = vld [vmem:[#allocation7 + $0x54] sm:$0xf]
    %v1588 = vld [vmem:[#allocation7 + $0x58] sm:$0xf]
    %v1589 = vld [vmem:[#allocation7 + $0x5c] sm:$0xf]
    %v1590 = vld [vmem:[#allocation7 + $0x60] sm:$0xf]
    %v1591 = vpack.c.bf16 %v1564, %v1564
    %v1592 = vpack.c.bf16 %v1565, %v1565
    %v1593 = vld [vmem:[%s8] sm:$0x1]
    %v1595 = vlaneseq
    %v1596 = vshrl.u32 %v1595, 7
    %v1597 = vsub.s32 0, %v1596
    %v1598 = vrot.slane %v1593, %v1597
    %v1625 = vunpack.c.l.b16 %v1566
    %v1626 = vunpack.c.l.b16 %v1567
    %v1627 = vunpack.c.l.b16 %v1568
    %v1628 = vunpack.c.l.b16 %v1569
    %v1629 = vunpack.c.l.b16 %v1570
    %v1630 = vunpack.c.l.b16 %v1571
    %v1631 = vunpack.c.l.b16 %v1572
    %v1632 = vunpack.c.l.b16 %v1573
    %v1633 = vunpack.c.l.b16 %v1574
    %v1634 = vunpack.c.l.b16 %v1575
    %v1635 = vunpack.c.l.b16 %v1576
    %v1636 = vunpack.c.l.b16 %v1577
    %v1637 = vunpack.c.l.b16 %v1578
    %v1638 = vunpack.c.l.b16 %v1579
    %v1639 = vunpack.c.l.b16 %v1580
    %v1640 = vunpack.c.l.b16 %v1581
    %v1641 = vunpack.c.l.b16 %v1582
    %v1642 = vunpack.c.l.b16 %v1583
    %v1643 = vunpack.c.l.b16 %v1584
    %v1644 = vunpack.c.l.b16 %v1585
    %v1645 = vunpack.c.l.b16 %v1586
    %v1646 = vunpack.c.l.b16 %v1587
    %v1647 = vunpack.c.l.b16 %v1588
    %v1648 = vunpack.c.l.b16 %v1589
    %v1649 = vunpack.c.l.b16 %v1590
    %v1650 = vpack.c.b16 %v1626, %v1625
    %v1651 = vpack.c.b16 %v1628, %v1627
    %v1652 = vpack.c.b16 %v1630, %v1629
    %v1653 = vpack.c.b16 %v1632, %v1631
    %v1654 = vpack.c.b16 %v1634, %v1633
    %v1655 = vpack.c.b16 %v1636, %v1635
    %v1656 = vpack.c.b16 %v1638, %v1637
    %v1657 = vpack.c.b16 %v1640, %v1639
    %v1658 = vpack.c.b16 %v1642, %v1641
    %v1659 = vpack.c.b16 %v1644, %v1643
    %v1660 = vpack.c.b16 %v1646, %v1645
    %v1661 = vpack.c.b16 %v1648, %v1647
    %v1662 = vpack.c.b16 %v1649, %v1649
    %v1676 = vsel %vm1504, %v1592, 0
    %vm1678 = vcmask 1043456
    %v1680 = vsel %vm1678, %v1662, 0
    %1682 = vmatprep.subr.bf16.mxu0 0
    %1683 = vmatpush1.bf16.msra.mxu0 %v1650
    %1684 = vmatprep.subr.bf16.mxu0 0
    %1685 = vmatpush1.bf16.msra.mxu0 %v1651
    %1686 = vmatprep.subr.bf16.mxu0 0
    %1687 = vmatpush1.bf16.msra.mxu0 %v1652
    %1688 = vmatprep.subr.bf16.mxu0 0
    %1689 = vmatpush1.bf16.msra.mxu0 %v1653
    %1690 = vmatprep.subr.bf16.mxu0 0
    %1691 = vmatpush1.bf16.msra.mxu0 %v1654
    %1692 = vmatprep.subr.bf16.mxu0 0
    %1693 = vmatpush1.bf16.msra.mxu0 %v1655
    %1694 = vmatprep.subr.bf16.mxu0 0
    %1695 = vmatpush1.bf16.msra.mxu0 %v1656
    %1696 = vmatprep.subr.bf16.mxu0 0
    %1697 = vmatpush1.bf16.msra.mxu0 %v1657
    %1698 = vmatprep.subr.bf16.mxu0 0
    %1699 = vmatpush1.bf16.msra.mxu0 %v1658
    %1700 = vmatprep.subr.bf16.mxu0 0
    %1701 = vmatpush1.bf16.msra.mxu0 %v1659
    %1702 = vmatprep.subr.bf16.mxu0 0
    %1703 = vmatpush1.bf16.msra.mxu0 %v1660
    %1704 = vmatprep.subr.bf16.mxu0 0
    %1705 = vmatpush1.bf16.msra.mxu0 %v1661
    %1706 = vmatprep.subr.bf16.mxu0 0
    %1707 = vmatpush1.bf16.msra.mxu0 %v1680
    %1708 = vmatprep.subr.bf16.mxu0 0
    %1709 = vmatpush1.bf16.msra.mxu0 0
    %1710 = vmatprep.subr.bf16.mxu0 0
    %1711 = vmatpush1.bf16.msra.mxu0 0
    %1712 = vmatprep.subr.bf16.mxu0 0
    %1713 = vmatpush1.bf16.msra.mxu0 0
    %1714 = vmatprep.mubr.bf16.mxu0 %v1676
    %1715 = vmatmul.mubr.bf16.gmra.mrb[0].mxu0 %v1591
    %v1716 = vpop.f32.mrb[0].mxu0
    %v1717 = vadd.f32 %v1598, %v1716
    %v1718 = vpop.f32.mrb[0].mxu0
    %v1719 = vpop.f32.mrb[0].mxu0
    %v1720 = vpop.f32.mrb[0].mxu0
    %1721 = vdwg.mxu0
    %v1722 = vxor.u32 %v1717, 2147483648
    %v1723 = vmul.f32 %v1722, 1.442695
    %v1724 = vpow.pop %v1723
    %v1725 = vadd.f32 %v1724, 1.0
    %v1726 = vrcp.pop %v1725
    %v1727 = vmul.f32 1.0, %v1726
    %v1728 = vpack.c.bf16 %v1727, %v1727
    %1729 = vst [vmem:[%s9] sm:$0xf] %v1728
    // Predicated region
    $region54: #{enhanced_actor_forward.1} parent=1 // pred_check
      _
    $region55: #{enhanced_actor_forward.1} parent=1 // pred_check_branch
      %1731 = sbr.rel (0) target = $region57
    $region56: #{enhanced_actor_forward.1} parent=1 // pred_region
      _
    $region57: #{enhanced_actor_forward.1} parent=1 // pred_fallthru
      _
    // Predicated region
    $region58: #{enhanced_actor_forward.1} parent=1 // pred_check
      _
    $region59: #{enhanced_actor_forward.1} parent=1 // pred_check_branch
      %1733 = sbr.rel (0) target = $region61
    $region60: #{enhanced_actor_forward.1} parent=1 // pred_region
      _
    $region61: #{enhanced_actor_forward.1} parent=1 // pred_fallthru
      _
    %1734 = vsyncpa [#allocation3], 1
    %1735 = vsyncpa [#allocation5], 1
    %1736 = vsyncpa [#allocation8], 1

</llo_original>
